<compile_context>
chip_gen: v6e
topology: v6e:2x2x1
jax: 0.10.0
libtpu: 0.0.40
codegen_flags: <defaults>
</compile_context>

<pallas_src>
import functools

import jax
import jax.numpy as jnp
from jax import lax
from jax.experimental import pallas as pl
from jax.experimental.pallas import tpu as pltpu


# ----------------------------------------------------------------------------
# Kernel: one transformer layer for one batch element; layers iterate on grid
# axis 1 with the activation carried in a resident VMEM scratch.
# ----------------------------------------------------------------------------
def _transformer_kernel(x_ref, g1_ref, b1_ref, wqkv_t_ref, wout_t_ref, bout_ref,
                        g2_ref, b2_ref, wff_ref, wff_t_ref,
                        o_ref,
                        act_ref, oh_ref,
                        *, heads, dim_head, scale, step_size, lambd, eps):
    layer = pl.program_id(1)
    bf16 = jnp.bfloat16

    # Load the batch-element input into the resident carry on the first layer.
    @pl.when(layer == 0)
    def _():
        act_ref[...] = x_ref[0]

    x = act_ref[...]                                   # (N, D) fp32

    # -------- PreNorm + Attention --------
    mu = jnp.mean(x, axis=-1, keepdims=True)
    var = jnp.mean((x - mu) ** 2, axis=-1, keepdims=True)
    y = (x - mu) * lax.rsqrt(var + eps)
    y = y * g1_ref[0] + b1_ref[0]                      # LayerNorm(dim), fp32

    # Shared qkv projection: single (N, D) @ (D, inner) MXU matmul.
    w = jnp.dot(y.astype(bf16), wqkv_t_ref[0],
                preferred_element_type=jnp.float32)    # (N, inner) fp32
    w_s = w * scale                                    # scale one dots operand once

    # TODO(synk): for large N, add a token-tile grid axis with an online softmax
    # instead of materializing the full (N, N) score matrix per head.
    for h in range(heads):
        lo = h * dim_head
        wh = w[:, lo:lo + dim_head].astype(bf16)       # (N, dh)
        whs = w_s[:, lo:lo + dim_head].astype(bf16)    # (N, dh), pre-scaled
        dots = lax.dot_general(whs, wh, (((1,), (1,)), ((), ())),
                               preferred_element_type=jnp.float32)  # (N, N)
        dots = dots - jnp.max(dots, axis=-1, keepdims=True)
        e = jnp.exp(dots)
        attn = e * pl.reciprocal(jnp.sum(e, axis=-1, keepdims=True), approx=True)
        oh_ref[:, lo:lo + dim_head] = jnp.dot(attn.astype(bf16), wh,
                                              preferred_element_type=jnp.float32)

    # Single fused output projection: (N, inner) @ (inner, D).
    attn_out = jnp.dot(oh_ref[...].astype(bf16), wout_t_ref[0],
                       preferred_element_type=jnp.float32) + bout_ref[0]
    grad_x = attn_out + x                              # residual

    # -------- PreNorm + FeedForward (ISTA step) --------
    mu2 = jnp.mean(grad_x, axis=-1, keepdims=True)
    var2 = jnp.mean((grad_x - mu2) ** 2, axis=-1, keepdims=True)
    y2 = (grad_x - mu2) * lax.rsqrt(var2 + eps)
    y2 = y2 * g2_ref[0] + b2_ref[0]

    # x1 = y2 @ Wff^T ;  grad_2 - grad_1 = (y2 - x1) @ Wff   (one matmul saved)
    x1 = jnp.dot(y2.astype(bf16), wff_t_ref[0],
                 preferred_element_type=jnp.float32)
    delta = jnp.dot((y2 - x1).astype(bf16), wff_ref[0],
                    preferred_element_type=jnp.float32)
    out = jnp.maximum(y2 + step_size * delta - step_size * lambd, 0.0)

    act_ref[...] = out                                 # carry to the next layer

    @pl.when(layer == pl.num_programs(1) - 1)
    def _():
        o_ref[0] = out


# ----------------------------------------------------------------------------
# Wrapper: one pallas_call for the whole depth-stacked transformer.
# ----------------------------------------------------------------------------
def transformer_forward(x, params, *, heads, dim_head,
                        step_size=0.1, lambd=0.1, eps=1e-5):
    B, N, D = x.shape
    depth = len(params)
    inner = heads * dim_head
    # TODO(synk): pad D / inner to multiples of 128 for production shapes so stores
    # are lane-dense; the small demo shapes below are left unpadded.

    f32, bf16 = jnp.float32, jnp.bfloat16
    g1 = jnp.stack([p['g1'].reshape(1, D) for p in params]).astype(f32)
    b1 = jnp.stack([p['b1'].reshape(1, D) for p in params]).astype(f32)
    wqkv_t = jnp.stack([p['wqkv'].T for p in params]).astype(bf16)   # (depth, D, inner)
    wout_t = jnp.stack([p['wout'].T for p in params]).astype(bf16)   # (depth, inner, D)
    bout = jnp.stack([p['bout'].reshape(1, D) for p in params]).astype(f32)
    g2 = jnp.stack([p['g2'].reshape(1, D) for p in params]).astype(f32)
    b2 = jnp.stack([p['b2'].reshape(1, D) for p in params]).astype(f32)
    wff = jnp.stack([p['wff'] for p in params]).astype(bf16)         # (depth, D, D)
    wff_t = jnp.stack([p['wff'].T for p in params]).astype(bf16)     # (depth, D, D)

    kern = functools.partial(
        _transformer_kernel, heads=heads, dim_head=dim_head,
        scale=dim_head ** -0.5, step_size=step_size, lambd=lambd, eps=eps)

    def wspec(shape):
        # per-layer weight block: leading depth axis indexed by the layer grid axis
        return pl.BlockSpec((1,) + shape, lambda b, l: (l, 0, 0))

    return pl.pallas_call(
        kern,
        out_shape=jax.ShapeDtypeStruct((B, N, D), jnp.float32),
        grid=(B, depth),
        in_specs=[
            pl.BlockSpec((1, N, D), lambda b, l: (b, 0, 0)),   # x (consumed at l==0)
            wspec((1, D)), wspec((1, D)),                      # LN1 gamma / beta
            wspec((D, inner)),                                 # Wqkv^T
            wspec((inner, D)), wspec((1, D)),                  # Wout^T, bout
            wspec((1, D)), wspec((1, D)),                      # LN2 gamma / beta
            wspec((D, D)), wspec((D, D)),                      # Wff, Wff^T
        ],
        out_specs=pl.BlockSpec((1, N, D), lambda b, l: (b, 0, 0)),
        scratch_shapes=[
            pltpu.VMEM((N, D), jnp.float32),       # resident activation carry
            pltpu.VMEM((N, inner), jnp.float32),   # per-head attention outputs
        ],
        compiler_params=pltpu.CompilerParams(
            dimension_semantics=("parallel", "arbitrary"),
            vmem_limit_bytes=64 * 1024 * 1024),
    )(x, g1, b1, wqkv_t, wout_t, bout, g2, b2, wff, wff_t)


# ----------------------------------------------------------------------------
# Deterministic parameter init (shapes follow the PyTorch module __init__).
# ----------------------------------------------------------------------------
def init_params(key, depth, dim, heads, dim_head):
    inner = heads * dim_head
    layers = []
    for _ in range(depth):
        key, *ks = jax.random.split(key, 7)
        layers.append(dict(
            g1=1.0 + 0.1 * jax.random.normal(ks[0], (1, dim), jnp.float32),
            b1=0.01 * jax.random.normal(ks[1], (1, dim), jnp.float32),
            wqkv=jax.random.normal(ks[2], (inner, dim), jnp.float32) / jnp.sqrt(dim),
            wout=jax.random.normal(ks[3], (dim, inner), jnp.float32) / jnp.sqrt(inner),
            bout=0.01 * jax.random.normal(ks[4], (1, dim), jnp.float32),
            g2=jnp.ones((1, dim), jnp.float32),
            b2=jnp.zeros((1, dim), jnp.float32),
            wff=jax.random.normal(ks[5], (dim, dim), jnp.float32) / jnp.sqrt(dim),
        ))
    return layers


# ----------------------------------------------------------------------------
# Pure-JAX fp32 reference (mirrors the PyTorch forward) for a sanity check.
# ----------------------------------------------------------------------------
def reference(x, params, *, heads, dim_head, step_size=0.1, lambd=0.1, eps=1e-5):
    scale = dim_head ** -0.5

    def ln(v, g, b):
        mu = v.mean(-1, keepdims=True)
        var = ((v - mu) ** 2).mean(-1, keepdims=True)
        return (v - mu) / jnp.sqrt(var + eps) * g + b

    for p in params:
        B, N, _ = x.shape
        y = ln(x, p['g1'][0], p['b1'][0])
        w = y @ p['wqkv'].T
        w3 = w.reshape(B, N, heads, dim_head).transpose(0, 2, 1, 3)   # b h n d
        dots = jnp.einsum('bhnd,bhmd->bhnm', w3, w3) * scale
        attn = jax.nn.softmax(dots, axis=-1)
        o = jnp.einsum('bhnm,bhmd->bhnd', attn, w3)
        o = o.transpose(0, 2, 1, 3).reshape(B, N, -1) @ p['wout'].T + p['bout'][0]
        grad_x = o + x
        y2 = ln(grad_x, p['g2'][0], p['b2'][0])
        W = p['wff']
        x1 = y2 @ W.T
        g1 = x1 @ W
        g2 = y2 @ W
        x = jnp.maximum(y2 + step_size * (g2 - g1) - step_size * lambd, 0.0)
    return x


if __name__ == "__main__":
    B, N, dim, heads, dim_head, depth = 2, 8, 32, 4, 8, 2
    key = jax.random.PRNGKey(0)
    key, kx = jax.random.split(key)
    x = jax.random.normal(kx, (B, N, dim), jnp.float32)
    params = init_params(key, depth, dim, heads, dim_head)

    out = transformer_forward(x, params, heads=heads, dim_head=dim_head)
    out = jax.block_until_ready(out)

    ref = reference(x, params, heads=heads, dim_head=dim_head)
    max_err = float(jnp.max(jnp.abs(out - ref)))
    assert out.shape == (B, N, dim)
    # Kernel uses bf16 MXU inputs (fp32 accumulation) + approx reciprocal, so compare
    # against the fp32 reference with a bf16-appropriate tolerance.
    assert jnp.allclose(out, ref, rtol=5e-2, atol=5e-2), max_err
    print("KERNEL_OK")
</pallas_src>

<mosaic_0001>
module attributes {stable_mosaic.version = 11 : i64} {
  func.func @_transformer_kernel(%arg0: i32, %arg1: i32, %arg2: memref<1x8x32xf32, #tpu.memory_space<vmem>>, %arg3: memref<1x1x32xf32, #tpu.memory_space<vmem>>, %arg4: memref<1x1x32xf32, #tpu.memory_space<vmem>>, %arg5: memref<1x32x32xbf16, #tpu.memory_space<vmem>>, %arg6: memref<1x32x32xbf16, #tpu.memory_space<vmem>>, %arg7: memref<1x1x32xf32, #tpu.memory_space<vmem>>, %arg8: memref<1x1x32xf32, #tpu.memory_space<vmem>>, %arg9: memref<1x1x32xf32, #tpu.memory_space<vmem>>, %arg10: memref<1x32x32xbf16, #tpu.memory_space<vmem>>, %arg11: memref<1x32x32xbf16, #tpu.memory_space<vmem>>, %arg12: memref<1x8x32xf32, #tpu.memory_space<vmem>>, %arg13: memref<8x32xf32, #tpu.memory_space<vmem>>, %arg14: memref<8x32xf32, #tpu.memory_space<vmem>>) attributes {dimension_semantics = [#tpu.dimension_semantics<parallel>, #tpu.dimension_semantics<arbitrary>], iteration_bounds = array<i64: 2, 2>, scalar_prefetch = 0 : i64, scratch_operands = 2 : i64, tpu.core_type = #tpu.core_type<tc>, window_params = [{transform_indices = @transform_0, window_bounds = array<i64: 1, 8, 32>}, {transform_indices = @transform_1, window_bounds = array<i64: 1, 1, 32>}, {transform_indices = @transform_2, window_bounds = array<i64: 1, 1, 32>}, {transform_indices = @transform_3, window_bounds = array<i64: 1, 32, 32>}, {transform_indices = @transform_4, window_bounds = array<i64: 1, 32, 32>}, {transform_indices = @transform_5, window_bounds = array<i64: 1, 1, 32>}, {transform_indices = @transform_6, window_bounds = array<i64: 1, 1, 32>}, {transform_indices = @transform_7, window_bounds = array<i64: 1, 1, 32>}, {transform_indices = @transform_8, window_bounds = array<i64: 1, 32, 32>}, {transform_indices = @transform_9, window_bounds = array<i64: 1, 32, 32>}, {transform_indices = @transform_10, window_bounds = array<i64: 1, 8, 32>}]} {
    %c0_i32 = arith.constant 0 : i32
    %0 = arith.cmpi eq, %arg1, %c0_i32 : i32
    %1 = arith.extui %0 : i1 to i32
    %c0_i32_0 = arith.constant 0 : i32
    %2 = arith.cmpi ne, %1, %c0_i32_0 : i32
    scf.if %2 {
      %c0_72 = arith.constant 0 : index
      %c0_73 = arith.constant 0 : index
      %c0_74 = arith.constant 0 : index
      %164 = vector.load %arg2[%c0_72, %c0_73, %c0_74] : memref<1x8x32xf32, #tpu.memory_space<vmem>>, vector<1x8x32xf32>
      %165 = vector.shape_cast %164 : vector<1x8x32xf32> to vector<8x32xf32>
      %c0_75 = arith.constant 0 : index
      %c0_76 = arith.constant 0 : index
      %166 = vector.load %arg13[%c0_75, %c0_76] : memref<8x32xf32, #tpu.memory_space<vmem>>, vector<8x32xf32>
      tpu.vector_store %arg13[%c0_75, %c0_76], %165 {strides = array<i32>} : memref<8x32xf32, #tpu.memory_space<vmem>>, vector<8x32xf32>,
    } else {
    }
    %c0 = arith.constant 0 : index
    %c0_1 = arith.constant 0 : index
    %3 = vector.load %arg13[%c0, %c0_1] : memref<8x32xf32, #tpu.memory_space<vmem>>, vector<8x32xf32>
    %cst = arith.constant dense<0.000000e+00> : vector<8xf32>
    %4 = vector.multi_reduction <add>, %3, %cst [1] : vector<8x32xf32> to vector<8xf32>
    %5 = vector.shape_cast %4 : vector<8xf32> to vector<8x1xf32>
    %cst_2 = arith.constant 3.200000e+01 : f32
    %6 = vector.broadcast %cst_2 : f32 to vector<8x1xf32>
    %7 = arith.divf %5, %6 : vector<8x1xf32>
    %8 = vector.broadcast %7 : vector<8x1xf32> to vector<8x32xf32>
    %9 = arith.subf %3, %8 : vector<8x32xf32>
    %10 = arith.mulf %9, %9 : vector<8x32xf32>
    %cst_3 = arith.constant dense<0.000000e+00> : vector<8xf32>
    %11 = vector.multi_reduction <add>, %10, %cst_3 [1] : vector<8x32xf32> to vector<8xf32>
    %12 = vector.shape_cast %11 : vector<8xf32> to vector<8x1xf32>
    %cst_4 = arith.constant 3.200000e+01 : f32
    %13 = vector.broadcast %cst_4 : f32 to vector<8x1xf32>
    %14 = arith.divf %12, %13 : vector<8x1xf32>
    %15 = vector.broadcast %7 : vector<8x1xf32> to vector<8x32xf32>
    %16 = arith.subf %3, %15 : vector<8x32xf32>
    %cst_5 = arith.constant 9.99999974E-6 : f32
    %17 = vector.broadcast %cst_5 : f32 to vector<8x1xf32>
    %18 = arith.addf %14, %17 : vector<8x1xf32>
    %19 = math.rsqrt %18 : vector<8x1xf32>
    %20 = vector.broadcast %19 : vector<8x1xf32> to vector<8x32xf32>
    %21 = arith.mulf %16, %20 : vector<8x32xf32>
    %c0_6 = arith.constant 0 : index
    %c0_7 = arith.constant 0 : index
    %c0_8 = arith.constant 0 : index
    %22 = vector.load %arg3[%c0_6, %c0_7, %c0_8] : memref<1x1x32xf32, #tpu.memory_space<vmem>>, vector<1x1x32xf32>
    %23 = vector.shape_cast %22 : vector<1x1x32xf32> to vector<1x32xf32>
    %24 = vector.broadcast %23 : vector<1x32xf32> to vector<8x32xf32>
    %25 = arith.mulf %21, %24 : vector<8x32xf32>
    %c0_9 = arith.constant 0 : index
    %c0_10 = arith.constant 0 : index
    %c0_11 = arith.constant 0 : index
    %26 = vector.load %arg4[%c0_9, %c0_10, %c0_11] : memref<1x1x32xf32, #tpu.memory_space<vmem>>, vector<1x1x32xf32>
    %27 = vector.shape_cast %26 : vector<1x1x32xf32> to vector<1x32xf32>
    %28 = vector.broadcast %27 : vector<1x32xf32> to vector<8x32xf32>
    %29 = arith.addf %25, %28 : vector<8x32xf32>
    %30 = arith.truncf %29 : vector<8x32xf32> to vector<8x32xbf16>
    %c0_12 = arith.constant 0 : index
    %c0_13 = arith.constant 0 : index
    %c0_14 = arith.constant 0 : index
    %31 = vector.load %arg5[%c0_12, %c0_13, %c0_14] : memref<1x32x32xbf16, #tpu.memory_space<vmem>>, vector<1x32x32xbf16>
    %32 = vector.shape_cast %31 : vector<1x32x32xbf16> to vector<32x32xbf16>
    %cst_15 = arith.constant dense<0.000000e+00> : vector<8x32xf32>
    %33 = tpu.matmul %30, %32, %cst_15 {dimension_numbers = #tpu.dot_dimension_numbers<[1], [0], [0], [1], [0, 0, 1, 1], [], []>} : vector<8x32xbf16>, vector<32x32xbf16>, vector<8x32xf32> -> vector<8x32xf32>
    %cst_16 = arith.constant 0.353553385 : f32
    %34 = vector.broadcast %cst_16 : f32 to vector<8x32xf32>
    %35 = arith.mulf %33, %34 : vector<8x32xf32>
    %36 = vector.extract_strided_slice %33 {offsets = [0, 0], sizes = [8, 8], strides = [1, 1]} : vector<8x32xf32> to vector<8x8xf32>
    %37 = arith.truncf %36 : vector<8x8xf32> to vector<8x8xbf16>
    %38 = vector.extract_strided_slice %35 {offsets = [0, 0], sizes = [8, 8], strides = [1, 1]} : vector<8x32xf32> to vector<8x8xf32>
    %39 = arith.truncf %38 : vector<8x8xf32> to vector<8x8xbf16>
    %cst_17 = arith.constant dense<0.000000e+00> : vector<8x8xf32>
    %40 = tpu.matmul %39, %37, %cst_17 {dimension_numbers = #tpu.dot_dimension_numbers<[1], [1], [0], [0], [0, 0, 1, 0], [], []>} : vector<8x8xbf16>, vector<8x8xbf16>, vector<8x8xf32> -> vector<8x8xf32>
    %cst_18 = arith.constant dense<0xFF800000> : vector<8xf32>
    %41 = vector.multi_reduction <maximumf>, %40, %cst_18 [1] : vector<8x8xf32> to vector<8xf32>
    %42 = vector.shape_cast %41 : vector<8xf32> to vector<8x1xf32>
    %43 = vector.broadcast %42 : vector<8x1xf32> to vector<8x8xf32>
    %44 = arith.subf %40, %43 : vector<8x8xf32>
    %45 = math.exp %44 : vector<8x8xf32>
    %cst_19 = arith.constant dense<0.000000e+00> : vector<8xf32>
    %46 = vector.multi_reduction <add>, %45, %cst_19 [1] : vector<8x8xf32> to vector<8xf32>
    %47 = vector.shape_cast %46 : vector<8xf32> to vector<8x1xf32>
    %48 = tpu.reciprocal %47 {approx = true} : vector<8x1xf32> -> vector<8x1xf32>
    %49 = vector.broadcast %48 : vector<8x1xf32> to vector<8x8xf32>
    %50 = arith.mulf %45, %49 : vector<8x8xf32>
    %51 = arith.truncf %50 : vector<8x8xf32> to vector<8x8xbf16>
    %cst_20 = arith.constant dense<0.000000e+00> : vector<8x8xf32>
    %52 = tpu.matmul %51, %37, %cst_20 {dimension_numbers = #tpu.dot_dimension_numbers<[1], [0], [0], [1], [0, 0, 1, 1], [], []>} : vector<8x8xbf16>, vector<8x8xbf16>, vector<8x8xf32> -> vector<8x8xf32>
    %c0_21 = arith.constant 0 : index
    %c0_22 = arith.constant 0 : index
    %53 = vector.load %arg14[%c0_21, %c0_22] : memref<8x32xf32, #tpu.memory_space<vmem>>, vector<8x8xf32>
    tpu.vector_store %arg14[%c0_21, %c0_22], %52 {strides = array<i32>} : memref<8x32xf32, #tpu.memory_space<vmem>>, vector<8x8xf32>,
    %54 = vector.extract_strided_slice %33 {offsets = [0, 8], sizes = [8, 8], strides = [1, 1]} : vector<8x32xf32> to vector<8x8xf32>
    %55 = arith.truncf %54 : vector<8x8xf32> to vector<8x8xbf16>
    %56 = vector.extract_strided_slice %35 {offsets = [0, 8], sizes = [8, 8], strides = [1, 1]} : vector<8x32xf32> to vector<8x8xf32>
    %57 = arith.truncf %56 : vector<8x8xf32> to vector<8x8xbf16>
    %cst_23 = arith.constant dense<0.000000e+00> : vector<8x8xf32>
    %58 = tpu.matmul %57, %55, %cst_23 {dimension_numbers = #tpu.dot_dimension_numbers<[1], [1], [0], [0], [0, 0, 1, 0], [], []>} : vector<8x8xbf16>, vector<8x8xbf16>, vector<8x8xf32> -> vector<8x8xf32>
    %cst_24 = arith.constant dense<0xFF800000> : vector<8xf32>
    %59 = vector.multi_reduction <maximumf>, %58, %cst_24 [1] : vector<8x8xf32> to vector<8xf32>
    %60 = vector.shape_cast %59 : vector<8xf32> to vector<8x1xf32>
    %61 = vector.broadcast %60 : vector<8x1xf32> to vector<8x8xf32>
    %62 = arith.subf %58, %61 : vector<8x8xf32>
    %63 = math.exp %62 : vector<8x8xf32>
    %cst_25 = arith.constant dense<0.000000e+00> : vector<8xf32>
    %64 = vector.multi_reduction <add>, %63, %cst_25 [1] : vector<8x8xf32> to vector<8xf32>
    %65 = vector.shape_cast %64 : vector<8xf32> to vector<8x1xf32>
    %66 = tpu.reciprocal %65 {approx = true} : vector<8x1xf32> -> vector<8x1xf32>
    %67 = vector.broadcast %66 : vector<8x1xf32> to vector<8x8xf32>
    %68 = arith.mulf %63, %67 : vector<8x8xf32>
    %69 = arith.truncf %68 : vector<8x8xf32> to vector<8x8xbf16>
    %cst_26 = arith.constant dense<0.000000e+00> : vector<8x8xf32>
    %70 = tpu.matmul %69, %55, %cst_26 {dimension_numbers = #tpu.dot_dimension_numbers<[1], [0], [0], [1], [0, 0, 1, 1], [], []>} : vector<8x8xbf16>, vector<8x8xbf16>, vector<8x8xf32> -> vector<8x8xf32>
    %c0_27 = arith.constant 0 : index
    %c8 = arith.constant 8 : index
    %71 = vector.load %arg14[%c0_27, %c8] : memref<8x32xf32, #tpu.memory_space<vmem>>, vector<8x8xf32>
    tpu.vector_store %arg14[%c0_27, %c8], %70 {strides = array<i32>} : memref<8x32xf32, #tpu.memory_space<vmem>>, vector<8x8xf32>,
    %72 = vector.extract_strided_slice %33 {offsets = [0, 16], sizes = [8, 8], strides = [1, 1]} : vector<8x32xf32> to vector<8x8xf32>
    %73 = arith.truncf %72 : vector<8x8xf32> to vector<8x8xbf16>
    %74 = vector.extract_strided_slice %35 {offsets = [0, 16], sizes = [8, 8], strides = [1, 1]} : vector<8x32xf32> to vector<8x8xf32>
    %75 = arith.truncf %74 : vector<8x8xf32> to vector<8x8xbf16>
    %cst_28 = arith.constant dense<0.000000e+00> : vector<8x8xf32>
    %76 = tpu.matmul %75, %73, %cst_28 {dimension_numbers = #tpu.dot_dimension_numbers<[1], [1], [0], [0], [0, 0, 1, 0], [], []>} : vector<8x8xbf16>, vector<8x8xbf16>, vector<8x8xf32> -> vector<8x8xf32>
    %cst_29 = arith.constant dense<0xFF800000> : vector<8xf32>
    %77 = vector.multi_reduction <maximumf>, %76, %cst_29 [1] : vector<8x8xf32> to vector<8xf32>
    %78 = vector.shape_cast %77 : vector<8xf32> to vector<8x1xf32>
    %79 = vector.broadcast %78 : vector<8x1xf32> to vector<8x8xf32>
    %80 = arith.subf %76, %79 : vector<8x8xf32>
    %81 = math.exp %80 : vector<8x8xf32>
    %cst_30 = arith.constant dense<0.000000e+00> : vector<8xf32>
    %82 = vector.multi_reduction <add>, %81, %cst_30 [1] : vector<8x8xf32> to vector<8xf32>
    %83 = vector.shape_cast %82 : vector<8xf32> to vector<8x1xf32>
    %84 = tpu.reciprocal %83 {approx = true} : vector<8x1xf32> -> vector<8x1xf32>
    %85 = vector.broadcast %84 : vector<8x1xf32> to vector<8x8xf32>
    %86 = arith.mulf %81, %85 : vector<8x8xf32>
    %87 = arith.truncf %86 : vector<8x8xf32> to vector<8x8xbf16>
    %cst_31 = arith.constant dense<0.000000e+00> : vector<8x8xf32>
    %88 = tpu.matmul %87, %73, %cst_31 {dimension_numbers = #tpu.dot_dimension_numbers<[1], [0], [0], [1], [0, 0, 1, 1], [], []>} : vector<8x8xbf16>, vector<8x8xbf16>, vector<8x8xf32> -> vector<8x8xf32>
    %c0_32 = arith.constant 0 : index
    %c16 = arith.constant 16 : index
    %89 = vector.load %arg14[%c0_32, %c16] : memref<8x32xf32, #tpu.memory_space<vmem>>, vector<8x8xf32>
    tpu.vector_store %arg14[%c0_32, %c16], %88 {strides = array<i32>} : memref<8x32xf32, #tpu.memory_space<vmem>>, vector<8x8xf32>,
    %90 = vector.extract_strided_slice %33 {offsets = [0, 24], sizes = [8, 8], strides = [1, 1]} : vector<8x32xf32> to vector<8x8xf32>
    %91 = arith.truncf %90 : vector<8x8xf32> to vector<8x8xbf16>
    %92 = vector.extract_strided_slice %35 {offsets = [0, 24], sizes = [8, 8], strides = [1, 1]} : vector<8x32xf32> to vector<8x8xf32>
    %93 = arith.truncf %92 : vector<8x8xf32> to vector<8x8xbf16>
    %cst_33 = arith.constant dense<0.000000e+00> : vector<8x8xf32>
    %94 = tpu.matmul %93, %91, %cst_33 {dimension_numbers = #tpu.dot_dimension_numbers<[1], [1], [0], [0], [0, 0, 1, 0], [], []>} : vector<8x8xbf16>, vector<8x8xbf16>, vector<8x8xf32> -> vector<8x8xf32>
    %cst_34 = arith.constant dense<0xFF800000> : vector<8xf32>
    %95 = vector.multi_reduction <maximumf>, %94, %cst_34 [1] : vector<8x8xf32> to vector<8xf32>
    %96 = vector.shape_cast %95 : vector<8xf32> to vector<8x1xf32>
    %97 = vector.broadcast %96 : vector<8x1xf32> to vector<8x8xf32>
    %98 = arith.subf %94, %97 : vector<8x8xf32>
    %99 = math.exp %98 : vector<8x8xf32>
    %cst_35 = arith.constant dense<0.000000e+00> : vector<8xf32>
    %100 = vector.multi_reduction <add>, %99, %cst_35 [1] : vector<8x8xf32> to vector<8xf32>
    %101 = vector.shape_cast %100 : vector<8xf32> to vector<8x1xf32>
    %102 = tpu.reciprocal %101 {approx = true} : vector<8x1xf32> -> vector<8x1xf32>
    %103 = vector.broadcast %102 : vector<8x1xf32> to vector<8x8xf32>
    %104 = arith.mulf %99, %103 : vector<8x8xf32>
    %105 = arith.truncf %104 : vector<8x8xf32> to vector<8x8xbf16>
    %cst_36 = arith.constant dense<0.000000e+00> : vector<8x8xf32>
    %106 = tpu.matmul %105, %91, %cst_36 {dimension_numbers = #tpu.dot_dimension_numbers<[1], [0], [0], [1], [0, 0, 1, 1], [], []>} : vector<8x8xbf16>, vector<8x8xbf16>, vector<8x8xf32> -> vector<8x8xf32>
    %c0_37 = arith.constant 0 : index
    %c24 = arith.constant 24 : index
    %107 = vector.load %arg14[%c0_37, %c24] : memref<8x32xf32, #tpu.memory_space<vmem>>, vector<8x8xf32>
    tpu.vector_store %arg14[%c0_37, %c24], %106 {strides = array<i32>} : memref<8x32xf32, #tpu.memory_space<vmem>>, vector<8x8xf32>,
    %c0_38 = arith.constant 0 : index
    %c0_39 = arith.constant 0 : index
    %108 = vector.load %arg14[%c0_38, %c0_39] : memref<8x32xf32, #tpu.memory_space<vmem>>, vector<8x32xf32>
    %109 = arith.truncf %108 : vector<8x32xf32> to vector<8x32xbf16>
    %c0_40 = arith.constant 0 : index
    %c0_41 = arith.constant 0 : index
    %c0_42 = arith.constant 0 : index
    %110 = vector.load %arg6[%c0_40, %c0_41, %c0_42] : memref<1x32x32xbf16, #tpu.memory_space<vmem>>, vector<1x32x32xbf16>
    %111 = vector.shape_cast %110 : vector<1x32x32xbf16> to vector<32x32xbf16>
    %cst_43 = arith.constant dense<0.000000e+00> : vector<8x32xf32>
    %112 = tpu.matmul %109, %111, %cst_43 {dimension_numbers = #tpu.dot_dimension_numbers<[1], [0], [0], [1], [0, 0, 1, 1], [], []>} : vector<8x32xbf16>, vector<32x32xbf16>, vector<8x32xf32> -> vector<8x32xf32>
    %c0_44 = arith.constant 0 : index
    %c0_45 = arith.constant 0 : index
    %c0_46 = arith.constant 0 : index
    %113 = vector.load %arg7[%c0_44, %c0_45, %c0_46] : memref<1x1x32xf32, #tpu.memory_space<vmem>>, vector<1x1x32xf32>
    %114 = vector.shape_cast %113 : vector<1x1x32xf32> to vector<1x32xf32>
    %115 = vector.broadcast %114 : vector<1x32xf32> to vector<8x32xf32>
    %116 = arith.addf %112, %115 : vector<8x32xf32>
    %117 = arith.addf %116, %3 : vector<8x32xf32>
    %cst_47 = arith.constant dense<0.000000e+00> : vector<8xf32>
    %118 = vector.multi_reduction <add>, %117, %cst_47 [1] : vector<8x32xf32> to vector<8xf32>
    %119 = vector.shape_cast %118 : vector<8xf32> to vector<8x1xf32>
    %cst_48 = arith.constant 3.200000e+01 : f32
    %120 = vector.broadcast %cst_48 : f32 to vector<8x1xf32>
    %121 = arith.divf %119, %120 : vector<8x1xf32>
    %122 = vector.broadcast %121 : vector<8x1xf32> to vector<8x32xf32>
    %123 = arith.subf %117, %122 : vector<8x32xf32>
    %124 = arith.mulf %123, %123 : vector<8x32xf32>
    %cst_49 = arith.constant dense<0.000000e+00> : vector<8xf32>
    %125 = vector.multi_reduction <add>, %124, %cst_49 [1] : vector<8x32xf32> to vector<8xf32>
    %126 = vector.shape_cast %125 : vector<8xf32> to vector<8x1xf32>
    %cst_50 = arith.constant 3.200000e+01 : f32
    %127 = vector.broadcast %cst_50 : f32 to vector<8x1xf32>
    %128 = arith.divf %126, %127 : vector<8x1xf32>
    %129 = vector.broadcast %121 : vector<8x1xf32> to vector<8x32xf32>
    %130 = arith.subf %117, %129 : vector<8x32xf32>
    %cst_51 = arith.constant 9.99999974E-6 : f32
    %131 = vector.broadcast %cst_51 : f32 to vector<8x1xf32>
    %132 = arith.addf %128, %131 : vector<8x1xf32>
    %133 = math.rsqrt %132 : vector<8x1xf32>
    %134 = vector.broadcast %133 : vector<8x1xf32> to vector<8x32xf32>
    %135 = arith.mulf %130, %134 : vector<8x32xf32>
    %c0_52 = arith.constant 0 : index
    %c0_53 = arith.constant 0 : index
    %c0_54 = arith.constant 0 : index
    %136 = vector.load %arg8[%c0_52, %c0_53, %c0_54] : memref<1x1x32xf32, #tpu.memory_space<vmem>>, vector<1x1x32xf32>
    %137 = vector.shape_cast %136 : vector<1x1x32xf32> to vector<1x32xf32>
    %138 = vector.broadcast %137 : vector<1x32xf32> to vector<8x32xf32>
    %139 = arith.mulf %135, %138 : vector<8x32xf32>
    %c0_55 = arith.constant 0 : index
    %c0_56 = arith.constant 0 : index
    %c0_57 = arith.constant 0 : index
    %140 = vector.load %arg9[%c0_55, %c0_56, %c0_57] : memref<1x1x32xf32, #tpu.memory_space<vmem>>, vector<1x1x32xf32>
    %141 = vector.shape_cast %140 : vector<1x1x32xf32> to vector<1x32xf32>
    %142 = vector.broadcast %141 : vector<1x32xf32> to vector<8x32xf32>
    %143 = arith.addf %139, %142 : vector<8x32xf32>
    %144 = arith.truncf %143 : vector<8x32xf32> to vector<8x32xbf16>
    %c0_58 = arith.constant 0 : index
    %c0_59 = arith.constant 0 : index
    %c0_60 = arith.constant 0 : index
    %145 = vector.load %arg11[%c0_58, %c0_59, %c0_60] : memref<1x32x32xbf16, #tpu.memory_space<vmem>>, vector<1x32x32xbf16>
    %146 = vector.shape_cast %145 : vector<1x32x32xbf16> to vector<32x32xbf16>
    %cst_61 = arith.constant dense<0.000000e+00> : vector<8x32xf32>
    %147 = tpu.matmul %144, %146, %cst_61 {dimension_numbers = #tpu.dot_dimension_numbers<[1], [0], [0], [1], [0, 0, 1, 1], [], []>} : vector<8x32xbf16>, vector<32x32xbf16>, vector<8x32xf32> -> vector<8x32xf32>
    %148 = arith.subf %143, %147 : vector<8x32xf32>
    %149 = arith.truncf %148 : vector<8x32xf32> to vector<8x32xbf16>
    %c0_62 = arith.constant 0 : index
    %c0_63 = arith.constant 0 : index
    %c0_64 = arith.constant 0 : index
    %150 = vector.load %arg10[%c0_62, %c0_63, %c0_64] : memref<1x32x32xbf16, #tpu.memory_space<vmem>>, vector<1x32x32xbf16>
    %151 = vector.shape_cast %150 : vector<1x32x32xbf16> to vector<32x32xbf16>
    %cst_65 = arith.constant dense<0.000000e+00> : vector<8x32xf32>
    %152 = tpu.matmul %149, %151, %cst_65 {dimension_numbers = #tpu.dot_dimension_numbers<[1], [0], [0], [1], [0, 0, 1, 1], [], []>} : vector<8x32xbf16>, vector<32x32xbf16>, vector<8x32xf32> -> vector<8x32xf32>
    %cst_66 = arith.constant 1.000000e-01 : f32
    %153 = vector.broadcast %cst_66 : f32 to vector<8x32xf32>
    %154 = arith.mulf %153, %152 : vector<8x32xf32>
    %155 = arith.addf %143, %154 : vector<8x32xf32>
    %cst_67 = arith.constant 0.00999999977 : f32
    %156 = vector.broadcast %cst_67 : f32 to vector<8x32xf32>
    %157 = arith.subf %155, %156 : vector<8x32xf32>
    %cst_68 = arith.constant 0.000000e+00 : f32
    %158 = vector.broadcast %cst_68 : f32 to vector<8x32xf32>
    %159 = arith.maximumf %157, %158 : vector<8x32xf32>
    %c0_69 = arith.constant 0 : index
    %c0_70 = arith.constant 0 : index
    %160 = vector.load %arg13[%c0_69, %c0_70] : memref<8x32xf32, #tpu.memory_space<vmem>>, vector<8x32xf32>
    tpu.vector_store %arg13[%c0_69, %c0_70], %159 {strides = array<i32>} : memref<8x32xf32, #tpu.memory_space<vmem>>, vector<8x32xf32>,
    %c1_i32 = arith.constant 1 : i32
    %161 = arith.cmpi eq, %arg1, %c1_i32 : i32
    %162 = arith.extui %161 : i1 to i32
    %c0_i32_71 = arith.constant 0 : i32
    %163 = arith.cmpi ne, %162, %c0_i32_71 : i32
    scf.if %163 {
      %c0_72 = arith.constant 0 : index
      %c0_73 = arith.constant 0 : index
      %c0_74 = arith.constant 0 : index
      %164 = vector.load %arg12[%c0_72, %c0_73, %c0_74] : memref<1x8x32xf32, #tpu.memory_space<vmem>>, vector<1x8x32xf32>
      %165 = vector.shape_cast %164 : vector<1x8x32xf32> to vector<8x32xf32>
      %166 = vector.shape_cast %159 : vector<8x32xf32> to vector<1x8x32xf32>
      tpu.vector_store %arg12[%c0_72, %c0_73, %c0_74], %166 {strides = array<i32>} : memref<1x8x32xf32, #tpu.memory_space<vmem>>, vector<1x8x32xf32>,
    } else {
    }
    return
  }
  func.func @transform_0(%arg0: i32, %arg1: i32) -> (i32, i32, i32) {
    %c0_i32 = arith.constant 0 : i32
    %c0_i32_0 = arith.constant 0 : i32
    %c0_i32_1 = arith.constant 0 : i32
    return %arg0, %c0_i32, %c0_i32_0 : i32, i32, i32
  }
  func.func @transform_1(%arg0: i32, %arg1: i32) -> (i32, i32, i32) {
    %c0_i32 = arith.constant 0 : i32
    %c0_i32_0 = arith.constant 0 : i32
    %c0_i32_1 = arith.constant 0 : i32
    return %arg1, %c0_i32, %c0_i32_0 : i32, i32, i32
  }
  func.func @transform_2(%arg0: i32, %arg1: i32) -> (i32, i32, i32) {
    %c0_i32 = arith.constant 0 : i32
    %c0_i32_0 = arith.constant 0 : i32
    %c0_i32_1 = arith.constant 0 : i32
    return %arg1, %c0_i32, %c0_i32_0 : i32, i32, i32
  }
  func.func @transform_3(%arg0: i32, %arg1: i32) -> (i32, i32, i32) {
    %c0_i32 = arith.constant 0 : i32
    %c0_i32_0 = arith.constant 0 : i32
    %c0_i32_1 = arith.constant 0 : i32
    return %arg1, %c0_i32, %c0_i32_0 : i32, i32, i32
  }
  func.func @transform_4(%arg0: i32, %arg1: i32) -> (i32, i32, i32) {
    %c0_i32 = arith.constant 0 : i32
    %c0_i32_0 = arith.constant 0 : i32
    %c0_i32_1 = arith.constant 0 : i32
    return %arg1, %c0_i32, %c0_i32_0 : i32, i32, i32
  }
  func.func @transform_5(%arg0: i32, %arg1: i32) -> (i32, i32, i32) {
    %c0_i32 = arith.constant 0 : i32
    %c0_i32_0 = arith.constant 0 : i32
    %c0_i32_1 = arith.constant 0 : i32
    return %arg1, %c0_i32, %c0_i32_0 : i32, i32, i32
  }
  func.func @transform_6(%arg0: i32, %arg1: i32) -> (i32, i32, i32) {
    %c0_i32 = arith.constant 0 : i32
    %c0_i32_0 = arith.constant 0 : i32
    %c0_i32_1 = arith.constant 0 : i32
    return %arg1, %c0_i32, %c0_i32_0 : i32, i32, i32
  }
  func.func @transform_7(%arg0: i32, %arg1: i32) -> (i32, i32, i32) {
    %c0_i32 = arith.constant 0 : i32
    %c0_i32_0 = arith.constant 0 : i32
    %c0_i32_1 = arith.constant 0 : i32
    return %arg1, %c0_i32, %c0_i32_0 : i32, i32, i32
  }
  func.func @transform_8(%arg0: i32, %arg1: i32) -> (i32, i32, i32) {
    %c0_i32 = arith.constant 0 : i32
    %c0_i32_0 = arith.constant 0 : i32
    %c0_i32_1 = arith.constant 0 : i32
    return %arg1, %c0_i32, %c0_i32_0 : i32, i32, i32
  }
  func.func @transform_9(%arg0: i32, %arg1: i32) -> (i32, i32, i32) {
    %c0_i32 = arith.constant 0 : i32
    %c0_i32_0 = arith.constant 0 : i32
    %c0_i32_1 = arith.constant 0 : i32
    return %arg1, %c0_i32, %c0_i32_0 : i32, i32, i32
  }
  func.func @transform_10(%arg0: i32, %arg1: i32) -> (i32, i32, i32) {
    %c0_i32 = arith.constant 0 : i32
    %c0_i32_0 = arith.constant 0 : i32
    %c0_i32_1 = arith.constant 0 : i32
    return %arg0, %c0_i32, %c0_i32_0 : i32, i32, i32
  }
}

</mosaic_0001>

<llo_original>
// kernel: tpu_custom_call.1
$region0: #{tpu_custom_call.1}
  #allocation0 [shape = 'u32[]', space=smem, size = 0x4, offset = 0x4, fixed_abs, tag = 'smem constant byte address 0x4 - core index']
  #allocation1 [shape = 'u32[144,128]{1,0:T(1,128)}', space=vmem, size = 0x12000, scoped, tag = 'internal scratch']
  #allocation2 [shape = 'f32[8,32]{1,0:T(8,128)}', space=vmem, size = 0x1000, scoped, tag = 'scratch operand']
  #allocation3 [shape = 'f32[8,32]{1,0:T(8,128)}', space=vmem, size = 0x1000, scoped, tag = 'scratch operand']
  %s0 = inlined_call_operand.hbm [shape: f32[2,8,32], index: 0, kind: input, shape index: {}]
  %s1 = inlined_call_operand.hbm [shape: f32[2,1,32], index: 1, kind: input, shape index: {}]
  %s2 = inlined_call_operand.vmem [shape: f32[2,1,32], index: 2, kind: input, shape index: {}]
  %s3 = inlined_call_operand.hbm [shape: bf16[2,32,32], index: 3, kind: input, shape index: {}]
  %s4 = inlined_call_operand.hbm [shape: bf16[2,32,32], index: 4, kind: input, shape index: {}]
  %s5 = inlined_call_operand.vmem [shape: f32[2,1,32], index: 5, kind: input, shape index: {}]
  %s6 = inlined_call_operand.vmem [shape: f32[2,1,32], index: 6, kind: input, shape index: {}]
  %s7 = inlined_call_operand.vmem [shape: f32[2,1,32], index: 7, kind: input, shape index: {}]
  %s8 = inlined_call_operand.hbm [shape: bf16[2,32,32], index: 8, kind: input, shape index: {}]
  %s9 = inlined_call_operand.hbm [shape: bf16[2,32,32], index: 9, kind: input, shape index: {}]
  %s10 = inlined_call_operand.hbm [shape: f32[2,8,32], index: 10, kind: output, shape index: {}]
  %s11 = sld [smem:[#allocation0]]
  $region105: #{tpu_custom_call.1} parent=0
    _
  %s13 = ssub.s32 1, %s11
  %s14 = scalar_select 0, %s13, %s11
  $region1: #{tpu_custom_call.1} parent=0
    #allocation4 [shape = 'u8[8192]{0}', space=vmem, size = 0x2000, scoped, tag = 'input window, operand 0']
    #allocation5 [shape = 's32[2]{0}', space=sflag, size = 0x8, scoped, tag = 'scoped memory for tpu_custom_call.1']
    #allocation6 [shape = 's32[2]{0}', space=sflag, size = 0x8, scoped, tag = 'scoped memory for tpu_custom_call.1']
    #allocation7 [shape = 'u8[1024]{0}', space=vmem, size = 0x400, scoped, tag = 'input window, operand 1']
    #allocation8 [shape = 's32[2]{0}', space=sflag, size = 0x8, scoped, tag = 'scoped memory for tpu_custom_call.1']
    #allocation9 [shape = 'u8[16384]{0}', space=vmem, size = 0x4000, scoped, tag = 'input window, operand 3']
    #allocation10 [shape = 'u8[16384]{0}', space=vmem, size = 0x4000, scoped, tag = 'input window, operand 4']
    #allocation11 [shape = 's32[2]{0}', space=sflag, size = 0x8, scoped, tag = 'scoped memory for tpu_custom_call.1']
    #allocation12 [shape = 'u8[16384]{0}', space=vmem, size = 0x4000, scoped, tag = 'input window, operand 8']
    #allocation13 [shape = 'u8[16384]{0}', space=vmem, size = 0x4000, scoped, tag = 'input window, operand 9']
    #allocation14 [shape = 's32[2]{0}', space=sflag, size = 0x8, scoped, tag = 'scoped memory for tpu_custom_call.1']
    #allocation15 [shape = 'u8[8192]{0}', space=vmem, size = 0x2000, scoped, tag = 'output window, operand 0']
    %15 = vsyncpa [#allocation5], 0
    %s16 = scalar_lea.sflag [#allocation5], 1
    %17 = vsyncpa %s16, 0
    %18 = vsyncpa [#allocation8], 0
    %s19 = scalar_lea.sflag [#allocation8], 1
    %20 = vsyncpa %s19, 0
    %21 = vsyncpa [#allocation11], 0
    %s22 = scalar_lea.sflag [#allocation11], 1
    %23 = vsyncpa %s22, 0
    %24 = vsyncpa [#allocation14], 0
    %s25 = scalar_lea.sflag [#allocation14], 1
    %26 = vsyncpa %s25, 0
    %27 = vsyncpa [#allocation6], 0
    %s28 = scalar_lea.sflag [#allocation6], 1
    %29 = vsyncpa %s28, 0
    loop: start=0, step=1, limit=6
    $region2: #{tpu_custom_call.1} parent=1 // loop_pre_header
      _
    $region3: #{tpu_custom_call.1} parent=1 // loop_header
      %s31 = sphi 0, %s35
      %p32 = scmp.ge.s32.totalorder %s31, 6
      %s38 = sphi 0, %s50
      %s39 = sphi 0, %s46
      %s40 = sphi 0, %s38
      %s41 = sphi 0, %s39
      %s42 = sphi 0, %s40
      %s43 = sphi 0, %s41
      %s53 = sphi 0, %s55
      %s56 = sphi 0, %s53
      %s57 = sphi 0, %s56
      %s73 = sphi 0, %s57
      %s79 = sphi 0, %s81
      %s82 = sphi 0, %s79
      %s83 = sphi 0, %s82
      %s99 = sphi 0, %s83
      %s105 = sphi 0, %s107
      %s108 = sphi 0, %s105
      %s109 = sphi 0, %s108
      %s125 = sphi 0, %s109
      %s131 = sphi 0, %s133
      %s134 = sphi 0, %s131
      %s135 = sphi 0, %s134
      %s151 = sphi 0, %s135
      %s157 = sphi 0, %s159
      %s160 = sphi 0, %s157
      %s161 = sphi 0, %s160
      %s177 = sphi 0, %s161
      %s183 = sphi 0, %s185
      %s186 = sphi 0, %s183
      %s187 = sphi 0, %s186
      %s203 = sphi 0, %s187
      %s209 = sphi 0, %s211
      %s212 = sphi 0, %s209
      %s213 = sphi 0, %s212
      %s229 = sphi 0, %s213
      %s235 = sphi 0, %s237
      %s238 = sphi 0, %s235
      %s239 = sphi 0, %s238
      %s255 = sphi 0, %s239
      %s261 = sphi 0, %s263
      %s264 = sphi 0, %s261
      %s265 = sphi 0, %s264
      %s281 = sphi 0, %s265
      %s287 = sphi 0, %s289
      %s290 = sphi 0, %s287
      %s291 = sphi 0, %s290
      %s307 = sphi 0, %s291
      %s313 = sphi 0, %s315
      %s316 = sphi 0, %s313
      %s317 = sphi 0, %s316
      %s333 = sphi 0, %s317
    $region4: #{tpu_custom_call.1} parent=1 // loop_header_branch
      %34 = sbr.rel (%p32) target = $region8
    $region5: #{tpu_custom_call.1} parent=1 // loop_body
      %s36 = ssub.s32 %s31, 1
      %s37 = ssub.s32 %s31, 2
      %s44 = sadd.s32 1, %s39
      %p45 = scmp.ge.s32.totalorder %s44, 2
      %s46 = scalar_select %p45, 0, %s44
      %s47 = sadd.s32 1, %s38
      %s48 = scalar_select %p45, %s47, %s38
      %p49 = scmp.ge.s32.totalorder %s48, 2
      %s50 = scalar_select %p49, 0, %s48
      %s51 = ssub.s32 %s38, %s50
      %p52 = scmp.eq.s32.totalorder %s51, 0
      %s54 = sadd.s32 %s53, 1
      %s55 = scalar_select %p52, %s53, %s54
      %p58 = pneg %p52
      %p59 = scmp.eq.s32.totalorder %s31, 3
      %p60 = por %p58, %p59
      %p61 = scmp.ne.s32.totalorder %s53, %s56
      %p62 = scmp.eq.s32.totalorder %s31, 0
      %p63 = por %p61, %p62
      %p64 = scmp.ne.s32.totalorder %s53, %s56
      %p65 = scmp.eq.s32.totalorder %s36, 3
      %p66 = por %p64, %p65
      %p67 = scmp.ne.s32.totalorder %s56, %s57
      %p68 = scmp.eq.s32.totalorder %s36, 0
      %p69 = por %p67, %p68
      %p70 = scmp.ne.s32.totalorder %s56, %s57
      %p71 = scmp.eq.s32.totalorder %s37, 3
      %p72 = por %p70, %p71
      %p74 = scmp.ne.s32.totalorder %s57, %s73
      %p75 = scmp.eq.s32.totalorder %s37, 0
      %p76 = por %p74, %p75
      %s77 = ssub.s32 %s39, %s46
      %p78 = scmp.eq.s32.totalorder %s77, 0
      %s80 = sadd.s32 %s79, 1
      %s81 = scalar_select %p78, %s79, %s80
      %p84 = pneg %p78
      %p85 = scmp.eq.s32.totalorder %s31, 3
      %p86 = por %p84, %p85
      %p87 = scmp.ne.s32.totalorder %s79, %s82
      %p88 = scmp.eq.s32.totalorder %s31, 0
      %p89 = por %p87, %p88
      %p90 = scmp.ne.s32.totalorder %s79, %s82
      %p91 = scmp.eq.s32.totalorder %s36, 3
      %p92 = por %p90, %p91
      %p93 = scmp.ne.s32.totalorder %s82, %s83
      %p94 = scmp.eq.s32.totalorder %s36, 0
      %p95 = por %p93, %p94
      %p96 = scmp.ne.s32.totalorder %s82, %s83
      %p97 = scmp.eq.s32.totalorder %s37, 3
      %p98 = por %p96, %p97
      %p100 = scmp.ne.s32.totalorder %s83, %s99
      %p101 = scmp.eq.s32.totalorder %s37, 0
      %p102 = por %p100, %p101
      %s103 = ssub.s32 %s39, %s46
      %p104 = scmp.eq.s32.totalorder %s103, 0
      %s106 = sadd.s32 %s105, 1
      %s107 = scalar_select %p104, %s105, %s106
      %p110 = pneg %p104
      %p111 = scmp.eq.s32.totalorder %s31, 3
      %p112 = por %p110, %p111
      %p113 = scmp.ne.s32.totalorder %s105, %s108
      %p114 = scmp.eq.s32.totalorder %s31, 0
      %p115 = por %p113, %p114
      %p116 = scmp.ne.s32.totalorder %s105, %s108
      %p117 = scmp.eq.s32.totalorder %s36, 3
      %p118 = por %p116, %p117
      %p119 = scmp.ne.s32.totalorder %s108, %s109
      %p120 = scmp.eq.s32.totalorder %s36, 0
      %p121 = por %p119, %p120
      %p122 = scmp.ne.s32.totalorder %s108, %s109
      %p123 = scmp.eq.s32.totalorder %s37, 3
      %p124 = por %p122, %p123
      %p126 = scmp.ne.s32.totalorder %s109, %s125
      %p127 = scmp.eq.s32.totalorder %s37, 0
      %p128 = por %p126, %p127
      %s129 = ssub.s32 %s39, %s46
      %p130 = scmp.eq.s32.totalorder %s129, 0
      %s132 = sadd.s32 %s131, 1
      %s133 = scalar_select %p130, %s131, %s132
      %p136 = pneg %p130
      %p137 = scmp.eq.s32.totalorder %s31, 3
      %p138 = por %p136, %p137
      %p139 = scmp.ne.s32.totalorder %s131, %s134
      %p140 = scmp.eq.s32.totalorder %s31, 0
      %p141 = por %p139, %p140
      %p142 = scmp.ne.s32.totalorder %s131, %s134
      %p143 = scmp.eq.s32.totalorder %s36, 3
      %p144 = por %p142, %p143
      %p145 = scmp.ne.s32.totalorder %s134, %s135
      %p146 = scmp.eq.s32.totalorder %s36, 0
      %p147 = por %p145, %p146
      %p148 = scmp.ne.s32.totalorder %s134, %s135
      %p149 = scmp.eq.s32.totalorder %s37, 3
      %p150 = por %p148, %p149
      %p152 = scmp.ne.s32.totalorder %s135, %s151
      %p153 = scmp.eq.s32.totalorder %s37, 0
      %p154 = por %p152, %p153
      %s155 = ssub.s32 %s39, %s46
      %p156 = scmp.eq.s32.totalorder %s155, 0
      %s158 = sadd.s32 %s157, 1
      %s159 = scalar_select %p156, %s157, %s158
      %p162 = pneg %p156
      %p163 = scmp.eq.s32.totalorder %s31, 3
      %p164 = por %p162, %p163
      %p165 = scmp.ne.s32.totalorder %s157, %s160
      %p166 = scmp.eq.s32.totalorder %s31, 0
      %p167 = por %p165, %p166
      %p168 = scmp.ne.s32.totalorder %s157, %s160
      %p169 = scmp.eq.s32.totalorder %s36, 3
      %p170 = por %p168, %p169
      %p171 = scmp.ne.s32.totalorder %s160, %s161
      %p172 = scmp.eq.s32.totalorder %s36, 0
      %p173 = por %p171, %p172
      %p174 = scmp.ne.s32.totalorder %s160, %s161
      %p175 = scmp.eq.s32.totalorder %s37, 3
      %p176 = por %p174, %p175
      %p178 = scmp.ne.s32.totalorder %s161, %s177
      %p179 = scmp.eq.s32.totalorder %s37, 0
      %p180 = por %p178, %p179
      %s181 = ssub.s32 %s39, %s46
      %p182 = scmp.eq.s32.totalorder %s181, 0
      %s184 = sadd.s32 %s183, 1
      %s185 = scalar_select %p182, %s183, %s184
      %p188 = pneg %p182
      %p189 = scmp.eq.s32.totalorder %s31, 3
      %p190 = por %p188, %p189
      %p191 = scmp.ne.s32.totalorder %s183, %s186
      %p192 = scmp.eq.s32.totalorder %s31, 0
      %p193 = por %p191, %p192
      %p194 = scmp.ne.s32.totalorder %s183, %s186
      %p195 = scmp.eq.s32.totalorder %s36, 3
      %p196 = por %p194, %p195
      %p197 = scmp.ne.s32.totalorder %s186, %s187
      %p198 = scmp.eq.s32.totalorder %s36, 0
      %p199 = por %p197, %p198
      %p200 = scmp.ne.s32.totalorder %s186, %s187
      %p201 = scmp.eq.s32.totalorder %s37, 3
      %p202 = por %p200, %p201
      %p204 = scmp.ne.s32.totalorder %s187, %s203
      %p205 = scmp.eq.s32.totalorder %s37, 0
      %p206 = por %p204, %p205
      %s207 = ssub.s32 %s39, %s46
      %p208 = scmp.eq.s32.totalorder %s207, 0
      %s210 = sadd.s32 %s209, 1
      %s211 = scalar_select %p208, %s209, %s210
      %p214 = pneg %p208
      %p215 = scmp.eq.s32.totalorder %s31, 3
      %p216 = por %p214, %p215
      %p217 = scmp.ne.s32.totalorder %s209, %s212
      %p218 = scmp.eq.s32.totalorder %s31, 0
      %p219 = por %p217, %p218
      %p220 = scmp.ne.s32.totalorder %s209, %s212
      %p221 = scmp.eq.s32.totalorder %s36, 3
      %p222 = por %p220, %p221
      %p223 = scmp.ne.s32.totalorder %s212, %s213
      %p224 = scmp.eq.s32.totalorder %s36, 0
      %p225 = por %p223, %p224
      %p226 = scmp.ne.s32.totalorder %s212, %s213
      %p227 = scmp.eq.s32.totalorder %s37, 3
      %p228 = por %p226, %p227
      %p230 = scmp.ne.s32.totalorder %s213, %s229
      %p231 = scmp.eq.s32.totalorder %s37, 0
      %p232 = por %p230, %p231
      %s233 = ssub.s32 %s39, %s46
      %p234 = scmp.eq.s32.totalorder %s233, 0
      %s236 = sadd.s32 %s235, 1
      %s237 = scalar_select %p234, %s235, %s236
      %p240 = pneg %p234
      %p241 = scmp.eq.s32.totalorder %s31, 3
      %p242 = por %p240, %p241
      %p243 = scmp.ne.s32.totalorder %s235, %s238
      %p244 = scmp.eq.s32.totalorder %s31, 0
      %p245 = por %p243, %p244
      %p246 = scmp.ne.s32.totalorder %s235, %s238
      %p247 = scmp.eq.s32.totalorder %s36, 3
      %p248 = por %p246, %p247
      %p249 = scmp.ne.s32.totalorder %s238, %s239
      %p250 = scmp.eq.s32.totalorder %s36, 0
      %p251 = por %p249, %p250
      %p252 = scmp.ne.s32.totalorder %s238, %s239
      %p253 = scmp.eq.s32.totalorder %s37, 3
      %p254 = por %p252, %p253
      %p256 = scmp.ne.s32.totalorder %s239, %s255
      %p257 = scmp.eq.s32.totalorder %s37, 0
      %p258 = por %p256, %p257
      %s259 = ssub.s32 %s39, %s46
      %p260 = scmp.eq.s32.totalorder %s259, 0
      %s262 = sadd.s32 %s261, 1
      %s263 = scalar_select %p260, %s261, %s262
      %p266 = pneg %p260
      %p267 = scmp.eq.s32.totalorder %s31, 3
      %p268 = por %p266, %p267
      %p269 = scmp.ne.s32.totalorder %s261, %s264
      %p270 = scmp.eq.s32.totalorder %s31, 0
      %p271 = por %p269, %p270
      %p272 = scmp.ne.s32.totalorder %s261, %s264
      %p273 = scmp.eq.s32.totalorder %s36, 3
      %p274 = por %p272, %p273
      %p275 = scmp.ne.s32.totalorder %s264, %s265
      %p276 = scmp.eq.s32.totalorder %s36, 0
      %p277 = por %p275, %p276
      %p278 = scmp.ne.s32.totalorder %s264, %s265
      %p279 = scmp.eq.s32.totalorder %s37, 3
      %p280 = por %p278, %p279
      %p282 = scmp.ne.s32.totalorder %s265, %s281
      %p283 = scmp.eq.s32.totalorder %s37, 0
      %p284 = por %p282, %p283
      %s285 = ssub.s32 %s39, %s46
      %p286 = scmp.eq.s32.totalorder %s285, 0
      %s288 = sadd.s32 %s287, 1
      %s289 = scalar_select %p286, %s287, %s288
      %p292 = pneg %p286
      %p293 = scmp.eq.s32.totalorder %s31, 3
      %p294 = por %p292, %p293
      %p295 = scmp.ne.s32.totalorder %s287, %s290
      %p296 = scmp.eq.s32.totalorder %s31, 0
      %p297 = por %p295, %p296
      %p298 = scmp.ne.s32.totalorder %s287, %s290
      %p299 = scmp.eq.s32.totalorder %s36, 3
      %p300 = por %p298, %p299
      %p301 = scmp.ne.s32.totalorder %s290, %s291
      %p302 = scmp.eq.s32.totalorder %s36, 0
      %p303 = por %p301, %p302
      %p304 = scmp.ne.s32.totalorder %s290, %s291
      %p305 = scmp.eq.s32.totalorder %s37, 3
      %p306 = por %p304, %p305
      %p308 = scmp.ne.s32.totalorder %s291, %s307
      %p309 = scmp.eq.s32.totalorder %s37, 0
      %p310 = por %p308, %p309
      %s311 = ssub.s32 %s38, %s50
      %p312 = scmp.eq.s32.totalorder %s311, 0
      %s314 = sadd.s32 %s313, 1
      %s315 = scalar_select %p312, %s313, %s314
      %p318 = pneg %p312
      %p319 = scmp.eq.s32.totalorder %s31, 3
      %p320 = por %p318, %p319
      %p321 = scmp.ne.s32.totalorder %s313, %s316
      %p322 = scmp.eq.s32.totalorder %s31, 0
      %p323 = por %p321, %p322
      %p324 = scmp.ne.s32.totalorder %s313, %s316
      %p325 = scmp.eq.s32.totalorder %s36, 3
      %p326 = por %p324, %p325
      %p327 = scmp.ne.s32.totalorder %s316, %s317
      %p328 = scmp.eq.s32.totalorder %s36, 0
      %p329 = por %p327, %p328
      %p330 = scmp.ne.s32.totalorder %s316, %s317
      %p331 = scmp.eq.s32.totalorder %s37, 3
      %p332 = por %p330, %p331
      %p334 = scmp.ne.s32.totalorder %s317, %s333
      %p335 = scmp.eq.s32.totalorder %s37, 0
      %p336 = por %p334, %p335
      %p337 = scmp.le.s32.totalorder 1, %s31
      %p338 = scmp.lt.s32.totalorder %s31, 5
      %p339 = pnand %p337, %p338
      %p340 = pneg %p339
      // Predicated region
      $region9: #{tpu_custom_call.1} parent=5 // pred_check
        _
      $region10: #{tpu_custom_call.1} parent=5 // pred_check_branch
        %342 = sbr.rel (%p339) target = $region12
      $region11: #{tpu_custom_call.1} parent=5 // pred_region
        %s343 = ssub.s32 %s31, 1
      $region12: #{tpu_custom_call.1} parent=5 // pred_fallthru
        _
      %p344 = scmp.lt.s32.totalorder %s31, 4
      // Predicated region
      $region13: #{tpu_custom_call.1} parent=5 // pred_check
        %p345 = pneg %p344
      $region14: #{tpu_custom_call.1} parent=5 // pred_check_branch
        %347 = sbr.rel (%p345) target = $region16
      $region15: #{tpu_custom_call.1} parent=5 // pred_region
        // Predicated region
        $region17: #{tpu_custom_call.1} parent=15 // pred_check
          %p348 = pneg %p63
        $region18: #{tpu_custom_call.1} parent=15 // pred_check_branch
          %350 = sbr.rel (%p348) target = $region20
        $region19: #{tpu_custom_call.1} parent=15 // pred_region
          %s351 = sand.u32 %s53, 1
          %s352 = scalar_lea.sflag [#allocation5], %s351
          %s353 = sand.u32 %s53, 1
          %s354 = smul.addr %s353, 8
          %s355 = scalar_lea.vmem [#allocation4], %s354
          %s357 = ssub.s32 128, 128
          %358 = vsyncadd %s352, %s357
          %s359 = smul.addr %s38, 128
          %s360 = scalar_lea.hbm %s0, %s359
          %s362 = sshll.u32 %s355, 4
          %s363 = int_to_ptr.vmem [resolvable:$true] %s362
          %365 = dma.hbm_to_vmem [thread:$0]  %s360, 128, %s363, %s352
        $region20: #{tpu_custom_call.1} parent=15 // pred_fallthru
          _
        // Predicated region
        $region21: #{tpu_custom_call.1} parent=15 // pred_check
          %p366 = pneg %p89
        $region22: #{tpu_custom_call.1} parent=15 // pred_check_branch
          %368 = sbr.rel (%p366) target = $region24
        $region23: #{tpu_custom_call.1} parent=15 // pred_region
          %s369 = sand.u32 %s31, 1
          %s370 = scalar_lea.sflag [#allocation8], %s369
          %s371 = sand.u32 %s79, 1
          %s372 = scalar_lea.vmem [#allocation7], %s371
          %s374 = ssub.s32 16, 16
          %375 = vsyncadd %s370, %s374
          %s376 = smul.addr %s39, 16
          %s377 = scalar_lea.hbm %s1, %s376
          %s379 = sshll.u32 %s372, 4
          %s380 = int_to_ptr.vmem [resolvable:$true] %s379
          %382 = dma.hbm_to_vmem [thread:$0]  %s377, 16, %s380, %s370
        $region24: #{tpu_custom_call.1} parent=15 // pred_fallthru
          _
        // Predicated region
        $region25: #{tpu_custom_call.1} parent=15 // pred_check
          %p383 = pneg %p115
        $region26: #{tpu_custom_call.1} parent=15 // pred_check_branch
          %385 = sbr.rel (%p383) target = $region28
        $region27: #{tpu_custom_call.1} parent=15 // pred_region
          %p386 = scmp.lt.s32.totalorder %s39, 1
          %s387 = scalar_select %p386, %s39, 1
          %s388 = scalar_lea.vmem %s2, %s387
        $region28: #{tpu_custom_call.1} parent=15 // pred_fallthru
          _
        // Predicated region
        $region29: #{tpu_custom_call.1} parent=15 // pred_check
          %p389 = pneg %p141
        $region30: #{tpu_custom_call.1} parent=15 // pred_check_branch
          %391 = sbr.rel (%p389) target = $region32
        $region31: #{tpu_custom_call.1} parent=15 // pred_region
          %s392 = sand.u32 %s31, 1
          %s393 = scalar_lea.sflag [#allocation8], %s392
          %s394 = sand.u32 %s131, 1
          %s395 = smul.addr %s394, 16
          %s396 = scalar_lea.vmem [#allocation9], %s395
          %s398 = ssub.s32 256, 256
          %399 = vsyncadd %s393, %s398
          %s400 = smul.addr %s39, 4
          %s401 = smul.addr %s400, 64
          %s402 = scalar_lea.hbm %s3, %s401
          %s403 = sshll.u32 %s396, 4
          %s404 = int_to_ptr.vmem [resolvable:$true] %s403
          %409 = dma.hbm_to_vmem [thread:$0]  %s402, 256, %s404, %s393, 64, 64, 4
        $region32: #{tpu_custom_call.1} parent=15 // pred_fallthru
          _
        // Predicated region
        $region33: #{tpu_custom_call.1} parent=15 // pred_check
          %p410 = pneg %p167
        $region34: #{tpu_custom_call.1} parent=15 // pred_check_branch
          %412 = sbr.rel (%p410) target = $region36
        $region35: #{tpu_custom_call.1} parent=15 // pred_region
          %s413 = sand.u32 %s31, 1
          %s414 = scalar_lea.sflag [#allocation11], %s413
          %s415 = sand.u32 %s157, 1
          %s416 = smul.addr %s415, 16
          %s417 = scalar_lea.vmem [#allocation10], %s416
          %s419 = ssub.s32 256, 256
          %420 = vsyncadd %s414, %s419
          %s421 = smul.addr %s39, 4
          %s422 = smul.addr %s421, 64
          %s423 = scalar_lea.hbm %s4, %s422
          %s424 = sshll.u32 %s417, 4
          %s425 = int_to_ptr.vmem [resolvable:$true] %s424
          %430 = dma.hbm_to_vmem [thread:$0]  %s423, 256, %s425, %s414, 64, 64, 4
        $region36: #{tpu_custom_call.1} parent=15 // pred_fallthru
          _
        // Predicated region
        $region37: #{tpu_custom_call.1} parent=15 // pred_check
          %p431 = pneg %p193
        $region38: #{tpu_custom_call.1} parent=15 // pred_check_branch
          %433 = sbr.rel (%p431) target = $region40
        $region39: #{tpu_custom_call.1} parent=15 // pred_region
          %p434 = scmp.lt.s32.totalorder %s39, 1
          %s435 = scalar_select %p434, %s39, 1
          %s436 = scalar_lea.vmem %s5, %s435
        $region40: #{tpu_custom_call.1} parent=15 // pred_fallthru
          _
        // Predicated region
        $region41: #{tpu_custom_call.1} parent=15 // pred_check
          %p437 = pneg %p219
        $region42: #{tpu_custom_call.1} parent=15 // pred_check_branch
          %439 = sbr.rel (%p437) target = $region44
        $region43: #{tpu_custom_call.1} parent=15 // pred_region
          %p440 = scmp.lt.s32.totalorder %s39, 1
          %s441 = scalar_select %p440, %s39, 1
          %s442 = scalar_lea.vmem %s6, %s441
        $region44: #{tpu_custom_call.1} parent=15 // pred_fallthru
          _
        // Predicated region
        $region45: #{tpu_custom_call.1} parent=15 // pred_check
          %p443 = pneg %p245
        $region46: #{tpu_custom_call.1} parent=15 // pred_check_branch
          %445 = sbr.rel (%p443) target = $region48
        $region47: #{tpu_custom_call.1} parent=15 // pred_region
          %p446 = scmp.lt.s32.totalorder %s39, 1
          %s447 = scalar_select %p446, %s39, 1
          %s448 = scalar_lea.vmem %s7, %s447
        $region48: #{tpu_custom_call.1} parent=15 // pred_fallthru
          _
        // Predicated region
        $region49: #{tpu_custom_call.1} parent=15 // pred_check
          %p449 = pneg %p271
        $region50: #{tpu_custom_call.1} parent=15 // pred_check_branch
          %451 = sbr.rel (%p449) target = $region52
        $region51: #{tpu_custom_call.1} parent=15 // pred_region
          %s452 = sand.u32 %s31, 1
          %s453 = scalar_lea.sflag [#allocation11], %s452
          %s454 = sand.u32 %s261, 1
          %s455 = smul.addr %s454, 16
          %s456 = scalar_lea.vmem [#allocation12], %s455
          %s458 = ssub.s32 256, 256
          %459 = vsyncadd %s453, %s458
          %s460 = smul.addr %s39, 4
          %s461 = smul.addr %s460, 64
          %s462 = scalar_lea.hbm %s8, %s461
          %s463 = sshll.u32 %s456, 4
          %s464 = int_to_ptr.vmem [resolvable:$true] %s463
          %469 = dma.hbm_to_vmem [thread:$0]  %s462, 256, %s464, %s453, 64, 64, 4
        $region52: #{tpu_custom_call.1} parent=15 // pred_fallthru
          _
        // Predicated region
        $region53: #{tpu_custom_call.1} parent=15 // pred_check
          %p470 = pneg %p297
        $region54: #{tpu_custom_call.1} parent=15 // pred_check_branch
          %472 = sbr.rel (%p470) target = $region56
        $region55: #{tpu_custom_call.1} parent=15 // pred_region
          %s473 = sand.u32 %s287, 1
          %s474 = scalar_lea.sflag [#allocation14], %s473
          %s475 = sand.u32 %s287, 1
          %s476 = smul.addr %s475, 16
          %s477 = scalar_lea.vmem [#allocation13], %s476
          %s479 = ssub.s32 256, 256
          %480 = vsyncadd %s474, %s479
          %s481 = smul.addr %s39, 4
          %s482 = smul.addr %s481, 64
          %s483 = scalar_lea.hbm %s9, %s482
          %s484 = sshll.u32 %s477, 4
          %s485 = int_to_ptr.vmem [resolvable:$true] %s484
          %490 = dma.hbm_to_vmem [thread:$0]  %s483, 256, %s485, %s474, 64, 64, 4
        $region56: #{tpu_custom_call.1} parent=15 // pred_fallthru
          _
      $region16: #{tpu_custom_call.1} parent=5 // pred_fallthru
        _
      %p491 = scmp.le.s32.totalorder 1, %s31
      %p492 = scmp.lt.s32.totalorder %s31, 5
      %p493 = pnand %p491, %p492
      %p494 = pneg %p493
      // Predicated region
      $region57: #{tpu_custom_call.1} parent=5 // pred_check
        _
      $region58: #{tpu_custom_call.1} parent=5 // pred_check_branch
        %496 = sbr.rel (%p493) target = $region60
      $region59: #{tpu_custom_call.1} parent=5 // pred_region
        %s497 = ssub.s32 %s31, 1
        %s498 = sand.u32 %s56, 1
        %s499 = scalar_lea.sflag [#allocation5], %s498
        %s500 = sand.u32 %s56, 1
        %s501 = smul.addr %s500, 8
        %s502 = scalar_lea.vmem [#allocation4], %s501
        // Predicated region
        $region61: #{tpu_custom_call.1} parent=59 // pred_check
          %p503 = pneg %p69
        $region62: #{tpu_custom_call.1} parent=59 // pred_check_branch
          %505 = sbr.rel (%p503) target = $region64
        $region63: #{tpu_custom_call.1} parent=59 // pred_region
          %506 = dma.done %s499, 128
        $region64: #{tpu_custom_call.1} parent=59 // pred_fallthru
          _
        %s507 = sand.u32 %s36, 1
        %s508 = scalar_lea.sflag [#allocation8], %s507
        %s509 = sand.u32 %s82, 1
        %s510 = scalar_lea.vmem [#allocation7], %s509
        // Predicated region
        $region65: #{tpu_custom_call.1} parent=59 // pred_check
          %p511 = pneg %p95
        $region66: #{tpu_custom_call.1} parent=59 // pred_check_branch
          %513 = sbr.rel (%p511) target = $region68
        $region67: #{tpu_custom_call.1} parent=59 // pred_region
          %514 = dma.done %s508, 16
        $region68: #{tpu_custom_call.1} parent=59 // pred_fallthru
          _
        %s515 = sand.u32 %s36, 1
        %s516 = scalar_lea.sflag [#allocation8], %s515
        %s517 = sand.u32 %s134, 1
        %s518 = smul.addr %s517, 16
        %s519 = scalar_lea.vmem [#allocation9], %s518
        // Predicated region
        $region69: #{tpu_custom_call.1} parent=59 // pred_check
          %p520 = pneg %p147
        $region70: #{tpu_custom_call.1} parent=59 // pred_check_branch
          %522 = sbr.rel (%p520) target = $region72
        $region71: #{tpu_custom_call.1} parent=59 // pred_region
          %523 = dma.done %s516, 256
        $region72: #{tpu_custom_call.1} parent=59 // pred_fallthru
          _
        %s524 = sand.u32 %s36, 1
        %s525 = scalar_lea.sflag [#allocation11], %s524
        %s526 = sand.u32 %s160, 1
        %s527 = smul.addr %s526, 16
        %s528 = scalar_lea.vmem [#allocation10], %s527
        // Predicated region
        $region73: #{tpu_custom_call.1} parent=59 // pred_check
          %p529 = pneg %p173
        $region74: #{tpu_custom_call.1} parent=59 // pred_check_branch
          %531 = sbr.rel (%p529) target = $region76
        $region75: #{tpu_custom_call.1} parent=59 // pred_region
          %532 = dma.done %s525, 256
        $region76: #{tpu_custom_call.1} parent=59 // pred_fallthru
          _
        %s533 = sand.u32 %s36, 1
        %s534 = scalar_lea.sflag [#allocation11], %s533
        %s535 = sand.u32 %s264, 1
        %s536 = smul.addr %s535, 16
        %s537 = scalar_lea.vmem [#allocation12], %s536
        // Predicated region
        $region77: #{tpu_custom_call.1} parent=59 // pred_check
          %p538 = pneg %p277
        $region78: #{tpu_custom_call.1} parent=59 // pred_check_branch
          %540 = sbr.rel (%p538) target = $region80
        $region79: #{tpu_custom_call.1} parent=59 // pred_region
          %541 = dma.done %s534, 256
        $region80: #{tpu_custom_call.1} parent=59 // pred_fallthru
          _
        %s542 = sand.u32 %s290, 1
        %s543 = scalar_lea.sflag [#allocation14], %s542
        %s544 = sand.u32 %s290, 1
        %s545 = smul.addr %s544, 16
        %s546 = scalar_lea.vmem [#allocation13], %s545
        // Predicated region
        $region81: #{tpu_custom_call.1} parent=59 // pred_check
          %p547 = pneg %p303
        $region82: #{tpu_custom_call.1} parent=59 // pred_check_branch
          %549 = sbr.rel (%p547) target = $region84
        $region83: #{tpu_custom_call.1} parent=59 // pred_region
          %550 = dma.done %s543, 256
        $region84: #{tpu_custom_call.1} parent=59 // pred_fallthru
          _
        %s551 = sand.u32 %s56, 1
        %s552 = scalar_lea.sflag [#allocation5], %s551
        %s553 = sand.u32 %s56, 1
        %s554 = smul.addr %s553, 8
        %s555 = scalar_lea.vmem [#allocation4], %s554
        %p556 = pneg %p69
        %p557 = pneg %p66
        %s558 = sand.u32 %s36, 1
        %s559 = scalar_lea.sflag [#allocation8], %s558
        %s560 = sand.u32 %s82, 1
        %s561 = scalar_lea.vmem [#allocation7], %s560
        %p562 = pneg %p95
        %p563 = pneg %p92
        %p564 = scmp.lt.s32.totalorder %s41, 1
        %s565 = scalar_select %p564, %s41, 1
        %s566 = scalar_lea.vmem %s2, %s565
        %p567 = pneg %p121
        %p568 = pneg %p118
        %s569 = sand.u32 %s36, 1
        %s570 = scalar_lea.sflag [#allocation8], %s569
        %s571 = sand.u32 %s134, 1
        %s572 = smul.addr %s571, 16
        %s573 = scalar_lea.vmem [#allocation9], %s572
        %p574 = pneg %p147
        %p575 = pneg %p144
        %s576 = sand.u32 %s36, 1
        %s577 = scalar_lea.sflag [#allocation11], %s576
        %s578 = sand.u32 %s160, 1
        %s579 = smul.addr %s578, 16
        %s580 = scalar_lea.vmem [#allocation10], %s579
        %p581 = pneg %p173
        %p582 = pneg %p170
        %p583 = scmp.lt.s32.totalorder %s41, 1
        %s584 = scalar_select %p583, %s41, 1
        %s585 = scalar_lea.vmem %s5, %s584
        %p586 = pneg %p199
        %p587 = pneg %p196
        %p588 = scmp.lt.s32.totalorder %s41, 1
        %s589 = scalar_select %p588, %s41, 1
        %s590 = scalar_lea.vmem %s6, %s589
        %p591 = pneg %p225
        %p592 = pneg %p222
        %p593 = scmp.lt.s32.totalorder %s41, 1
        %s594 = scalar_select %p593, %s41, 1
        %s595 = scalar_lea.vmem %s7, %s594
        %p596 = pneg %p251
        %p597 = pneg %p248
        %s598 = sand.u32 %s36, 1
        %s599 = scalar_lea.sflag [#allocation11], %s598
        %s600 = sand.u32 %s264, 1
        %s601 = smul.addr %s600, 16
        %s602 = scalar_lea.vmem [#allocation12], %s601
        %p603 = pneg %p277
        %p604 = pneg %p274
        %s605 = sand.u32 %s290, 1
        %s606 = scalar_lea.sflag [#allocation14], %s605
        %s607 = sand.u32 %s290, 1
        %s608 = smul.addr %s607, 16
        %s609 = scalar_lea.vmem [#allocation13], %s608
        %p610 = pneg %p303
        %p611 = pneg %p300
        %p612 = pneg %p329
        %p613 = pneg %p326
        %s614 = sand.u32 %s316, 1
        %s615 = scalar_lea.sflag [#allocation6], %s614
        %s616 = sand.u32 %s316, 1
        %s617 = smul.addr %s616, 8
        %s618 = scalar_lea.vmem [#allocation15], %s617
        %p619 = scmp.lt.s32.totalorder %s41, 1
        %s620 = scalar_select %p619, %s41, 1
        %s621 = scalar_lea.vmem %s2, %s620
        %p622 = scmp.lt.s32.totalorder %s41, 1
        %s623 = scalar_select %p622, %s41, 1
        %s624 = scalar_lea.vmem %s5, %s623
        %p625 = scmp.lt.s32.totalorder %s41, 1
        %s626 = scalar_select %p625, %s41, 1
        %s627 = scalar_lea.vmem %s6, %s626
        %p628 = scmp.lt.s32.totalorder %s41, 1
        %s629 = scalar_select %p628, %s41, 1
        %s630 = scalar_lea.vmem %s7, %s629
        %p632 = scmp.eq.s32.totalorder %s41, 0
        // Predicated region
        $region85: #{tpu_custom_call.1} parent=59 // pred_check
          %p633 = pneg %p632
        $region86: #{tpu_custom_call.1} parent=59 // pred_check_branch
          %635 = sbr.rel (%p633) target = $region88
        $region87: #{tpu_custom_call.1} parent=59 // pred_region
          %v636 = vld [vmem:[%s502] sm:$0xff]
          %vm637 = vcmask 261120
          %638 = vst.msk [vmem:[#allocation2] sm:$0xff] %vm637, %v636
        $region88: #{tpu_custom_call.1} parent=59 // pred_fallthru
          _
        %v639 = vld [vmem:[#allocation2] sm:$0xff]
        %vm640 = vcmask 261120
        %v641 = vsel %vm640, %v639, 0.0
        %642 = vadd.xlane.f32.xlu0 %v641
        %v643 = vpop.xlane.xlu0 %642
        %v644 = vrcp.pop 32.0
        %v645 = vmul.f32 %v643, %v644
        %v646 = vsub.f32 %v639, %v645
        %v647 = vmul.f32 %v646, %v646
        %v648 = vsel %vm640, %v647, 0.0
        %649 = vadd.xlane.f32.xlu0 %v648
        %v650 = vpop.xlane.xlu0 %649
        %v651 = vmul.f32 %v650, %v644
        %v652 = vadd.f32 %v651, 1e-05
        %v653 = vrsqrt.pop %v652
        %v654 = vmul.f32 %v646, %v653
        %v655 = vld [vmem:[%s510] sm:$0x1]
        %v657 = vlaneseq
        %v658 = vshrl.u32 %v657, 7
        %v659 = vsub.s32 0, %v658
        %v660 = vrot.slane %v655, %v659
        %v662 = vmul.f32 %v654, %v660
        %v663 = vld [vmem:[%s621] sm:$0x1]
        %v665 = vlaneseq
        %v666 = vshrl.u32 %v665, 7
        %v667 = vsub.s32 0, %v666
        %v668 = vrot.slane %v663, %v667
        %v670 = vadd.f32 %v662, %v668
        %v671 = vpack.c.bf16 %v670, %v670
        %v672 = vld [vmem:[%s519] sm:$0xf]
        %v673 = vld [vmem:[%s519 + $0x4] sm:$0xf]
        %v674 = vld [vmem:[%s519 + $0x8] sm:$0xf]
        %v675 = vld [vmem:[%s519 + $0xc] sm:$0xf]
        %v680 = vunpack.c.l.b16 %v672
        %v681 = vunpack.c.l.b16 %v673
        %v682 = vunpack.c.l.b16 %v674
        %v683 = vunpack.c.l.b16 %v675
        %v684 = vpack.c.b16 %v681, %v680
        %v685 = vpack.c.b16 %v683, %v682
        %v689 = vsel %vm640, %v671, 0
        %691 = vmatprep.subr.bf16.mxu0 0
        %692 = vmatpush1.bf16.msra.mxu0 0
        %693 = vmatprep.subr.bf16.mxu0 0
        %694 = vmatpush1.bf16.msra.mxu0 0
        %695 = vmatprep.subr.bf16.mxu0 0
        %696 = vmatpush1.bf16.msra.mxu0 0
        %697 = vmatprep.subr.bf16.mxu0 0
        %698 = vmatpush1.bf16.msra.mxu0 0
        %699 = vmatprep.subr.bf16.mxu0 0
        %700 = vmatpush1.bf16.msra.mxu0 0
        %701 = vmatprep.subr.bf16.mxu0 0
        %702 = vmatpush1.bf16.msra.mxu0 0
        %703 = vmatprep.subr.bf16.mxu0 0
        %704 = vmatpush1.bf16.msra.mxu0 %v685
        %705 = vmatprep.subr.bf16.mxu0 0
        %706 = vmatpush1.bf16.msra.mxu0 %v684
        %707 = vmatprep.subr.bf16.mxu0 0
        %708 = vmatpush2.bf16.msra.mxu0 0
        %709 = vmatprep.subr.bf16.mxu0 0
        %710 = vmatpush2.bf16.msra.mxu0 0
        %711 = vmatprep.subr.bf16.mxu0 0
        %712 = vmatpush2.bf16.msra.mxu0 0
        %713 = vmatprep.subr.bf16.mxu0 0
        %714 = vmatpush2.bf16.msra.mxu0 0
        %715 = vmatprep.subr.bf16.mxu0 0
        %716 = vmatpush2.bf16.msra.mxu0 0
        %717 = vmatprep.subr.bf16.mxu0 0
        %718 = vmatpush2.bf16.msra.mxu0 0
        %719 = vmatprep.subr.bf16.mxu0 0
        %720 = vmatpush2.bf16.msra.mxu0 0
        %721 = vmatprep.subr.bf16.mxu0 0
        %722 = vmatpush2.bf16.msra.mxu0 0
        %723 = vmatprep.mubr.bf16.mxu0 0
        %724 = vmatmul.mubr.bf16.gmra.mxu0 %v689
        %v725 = vpop.f32.mrf.mxu0
        %v726 = vadd.f32 0.0, %v725
        %v727 = vpop.f32.mrf.mxu0
        %v728 = vpop.f32.mrf.mxu0
        %v729 = vpop.f32.mrf.mxu0
        %730 = vdwg.mxu0
        %v731 = vmul.f32 %v726, 0.35355338
        %v732 = vpack.c.bf16 %v726, %v726
        %v733 = vpack.c.bf16 %v731, %v731
        %vm734 = vcmask 64512
        %v736 = vsel %vm734, %v733, 0
        %v739 = vsel %vm734, %v732, 0
        %741 = vmatprep.subr.bf16.mxu0 0
        %742 = vmatpush1.bf16.xpose.msra.mxu0 0
        %743 = vmatprep.subr.bf16.mxu0 0
        %744 = vmatpush1.bf16.xpose.msra.mxu0 0
        %745 = vmatprep.subr.bf16.mxu0 0
        %746 = vmatpush1.bf16.xpose.msra.mxu0 0
        %747 = vmatprep.subr.bf16.mxu0 0
        %748 = vmatpush1.bf16.xpose.msra.mxu0 0
        %749 = vmatprep.subr.bf16.mxu0 0
        %750 = vmatpush1.bf16.xpose.msra.mxu0 0
        %751 = vmatprep.subr.bf16.mxu0 0
        %752 = vmatpush1.bf16.xpose.msra.mxu0 0
        %753 = vmatprep.subr.bf16.mxu0 0
        %754 = vmatpush1.bf16.xpose.msra.mxu0 0
        %755 = vmatprep.subr.bf16.mxu0 0
        %756 = vmatpush1.bf16.xpose.msra.mxu0 %v739
        %757 = vmatprep.subr.bf16.mxu0 0
        %758 = vmatpush2.bf16.xpose.msra.mxu0 0
        %759 = vmatprep.subr.bf16.mxu0 0
        %760 = vmatpush2.bf16.xpose.msra.mxu0 0
        %761 = vmatprep.subr.bf16.mxu0 0
        %762 = vmatpush2.bf16.xpose.msra.mxu0 0
        %763 = vmatprep.subr.bf16.mxu0 0
        %764 = vmatpush2.bf16.xpose.msra.mxu0 0
        %765 = vmatprep.subr.bf16.mxu0 0
        %766 = vmatpush2.bf16.xpose.msra.mxu0 0
        %767 = vmatprep.subr.bf16.mxu0 0
        %768 = vmatpush2.bf16.xpose.msra.mxu0 0
        %769 = vmatprep.subr.bf16.mxu0 0
        %770 = vmatpush2.bf16.xpose.msra.mxu0 0
        %771 = vmatprep.subr.bf16.mxu0 0
        %772 = vmatpush2.bf16.xpose.msra.mxu0 0
        %773 = vmatprep.mubr.bf16.mxu0 0
        %774 = vmatmul.mubr.bf16.gmra.mxu0 %v736
        %v775 = vpop.f32.mrf.mxu0
        %v776 = vadd.f32 0.0, %v775
        %v777 = vpop.f32.mrf.mxu0
        %v778 = vpop.f32.mrf.mxu0
        %v779 = vpop.f32.mrf.mxu0
        %780 = vdwg.mxu0
        %v781 = vsel %vm734, %v776, -inf
        %782 = vmax.xlane.f32.xlu0 %v781
        %v783 = vpop.xlane.xlu0 %782
        %v784 = vsub.f32 %v776, %v783
        %v785 = vmul.f32 %v784, 1.442695
        %v786 = vpow.pop %v785
        %v787 = vsel %vm734, %v786, 0.0
        %788 = vadd.xlane.f32.xlu0 %v787
        %v789 = vpop.xlane.xlu0 %788
        %v790 = vrcp.pop %v789
        %v791 = vmul.f32 %v786, %v790
        %v792 = vpack.c.bf16 %v791, %v791
        %v794 = vsel %vm734, %v792, 0
        %vm796 = vcmask 1043456
        %v797 = vsel %vm796, %v732, 0
        %799 = vmatprep.subr.bf16.mxu0 0
        %800 = vmatpush1.bf16.msra.mxu0 0
        %801 = vmatprep.subr.bf16.mxu0 0
        %802 = vmatpush1.bf16.msra.mxu0 0
        %803 = vmatprep.subr.bf16.mxu0 0
        %804 = vmatpush1.bf16.msra.mxu0 0
        %805 = vmatprep.subr.bf16.mxu0 0
        %806 = vmatpush1.bf16.msra.mxu0 0
        %807 = vmatprep.subr.bf16.mxu0 0
        %808 = vmatpush1.bf16.msra.mxu0 0
        %809 = vmatprep.subr.bf16.mxu0 0
        %810 = vmatpush1.bf16.msra.mxu0 0
        %811 = vmatprep.subr.bf16.mxu0 0
        %812 = vmatpush1.bf16.msra.mxu0 0
        %813 = vmatprep.subr.bf16.mxu0 0
        %814 = vmatpush1.bf16.msra.mxu0 %v797
        %815 = vmatprep.subr.bf16.mxu0 0
        %816 = vmatpush2.bf16.msra.mxu0 0
        %817 = vmatprep.subr.bf16.mxu0 0
        %818 = vmatpush2.bf16.msra.mxu0 0
        %819 = vmatprep.subr.bf16.mxu0 0
        %820 = vmatpush2.bf16.msra.mxu0 0
        %821 = vmatprep.subr.bf16.mxu0 0
        %822 = vmatpush2.bf16.msra.mxu0 0
        %823 = vmatprep.subr.bf16.mxu0 0
        %824 = vmatpush2.bf16.msra.mxu0 0
        %825 = vmatprep.subr.bf16.mxu0 0
        %826 = vmatpush2.bf16.msra.mxu0 0
        %827 = vmatprep.subr.bf16.mxu0 0
        %828 = vmatpush2.bf16.msra.mxu0 0
        %829 = vmatprep.subr.bf16.mxu0 0
        %830 = vmatpush2.bf16.msra.mxu0 0
        %831 = vmatprep.mubr.bf16.mxu0 0
        %832 = vmatmul.mubr.bf16.gmra.mxu0 %v794
        %v833 = vpop.f32.mrf.mxu0
        %v834 = vadd.f32 0.0, %v833
        %v835 = vpop.f32.mrf.mxu0
        %v836 = vpop.f32.mrf.mxu0
        %v837 = vpop.f32.mrf.mxu0
        %838 = vdwg.mxu0
        %839 = vst.msk [vmem:[#allocation3] sm:$0xff] %vm734, %v834
        %841 = vrot.lane.b32.xlu0 %v733, 120
        %v842 = vpop.permute.xlu0 %841
        %844 = vrot.lane.b32.xlu0 %v732, 120
        %v845 = vpop.permute.xlu0 %844
        %v847 = vsel %vm734, %v842, 0
        %v850 = vsel %vm734, %v845, 0
        %852 = vmatprep.subr.bf16.mxu0 0
        %853 = vmatpush1.bf16.xpose.msra.mxu0 0
        %854 = vmatprep.subr.bf16.mxu0 0
        %855 = vmatpush1.bf16.xpose.msra.mxu0 0
        %856 = vmatprep.subr.bf16.mxu0 0
        %857 = vmatpush1.bf16.xpose.msra.mxu0 0
        %858 = vmatprep.subr.bf16.mxu0 0
        %859 = vmatpush1.bf16.xpose.msra.mxu0 0
        %860 = vmatprep.subr.bf16.mxu0 0
        %861 = vmatpush1.bf16.xpose.msra.mxu0 0
        %862 = vmatprep.subr.bf16.mxu0 0
        %863 = vmatpush1.bf16.xpose.msra.mxu0 0
        %864 = vmatprep.subr.bf16.mxu0 0
        %865 = vmatpush1.bf16.xpose.msra.mxu0 0
        %866 = vmatprep.subr.bf16.mxu0 0
        %867 = vmatpush1.bf16.xpose.msra.mxu0 %v850
        %868 = vmatprep.subr.bf16.mxu0 0
        %869 = vmatpush2.bf16.xpose.msra.mxu0 0
        %870 = vmatprep.subr.bf16.mxu0 0
        %871 = vmatpush2.bf16.xpose.msra.mxu0 0
        %872 = vmatprep.subr.bf16.mxu0 0
        %873 = vmatpush2.bf16.xpose.msra.mxu0 0
        %874 = vmatprep.subr.bf16.mxu0 0
        %875 = vmatpush2.bf16.xpose.msra.mxu0 0
        %876 = vmatprep.subr.bf16.mxu0 0
        %877 = vmatpush2.bf16.xpose.msra.mxu0 0
        %878 = vmatprep.subr.bf16.mxu0 0
        %879 = vmatpush2.bf16.xpose.msra.mxu0 0
        %880 = vmatprep.subr.bf16.mxu0 0
        %881 = vmatpush2.bf16.xpose.msra.mxu0 0
        %882 = vmatprep.subr.bf16.mxu0 0
        %883 = vmatpush2.bf16.xpose.msra.mxu0 0
        %884 = vmatprep.mubr.bf16.mxu0 0
        %885 = vmatmul.mubr.bf16.gmra.mxu0 %v847
        %v886 = vpop.f32.mrf.mxu0
        %v887 = vadd.f32 0.0, %v886
        %v888 = vpop.f32.mrf.mxu0
        %v889 = vpop.f32.mrf.mxu0
        %v890 = vpop.f32.mrf.mxu0
        %891 = vdwg.mxu0
        %v892 = vsel %vm734, %v887, -inf
        %893 = vmax.xlane.f32.xlu0 %v892
        %v894 = vpop.xlane.xlu0 %893
        %v895 = vsub.f32 %v887, %v894
        %v896 = vmul.f32 %v895, 1.442695
        %v897 = vpow.pop %v896
        %v898 = vsel %vm734, %v897, 0.0
        %899 = vadd.xlane.f32.xlu0 %v898
        %v900 = vpop.xlane.xlu0 %899
        %v901 = vrcp.pop %v900
        %v902 = vmul.f32 %v897, %v901
        %v903 = vpack.c.bf16 %v902, %v902
        %v905 = vsel %vm734, %v903, 0
        %v907 = vsel %vm796, %v845, 0
        %909 = vmatprep.subr.bf16.mxu0 0
        %910 = vmatpush1.bf16.msra.mxu0 0
        %911 = vmatprep.subr.bf16.mxu0 0
        %912 = vmatpush1.bf16.msra.mxu0 0
        %913 = vmatprep.subr.bf16.mxu0 0
        %914 = vmatpush1.bf16.msra.mxu0 0
        %915 = vmatprep.subr.bf16.mxu0 0
        %916 = vmatpush1.bf16.msra.mxu0 0
        %917 = vmatprep.subr.bf16.mxu0 0
        %918 = vmatpush1.bf16.msra.mxu0 0
        %919 = vmatprep.subr.bf16.mxu0 0
        %920 = vmatpush1.bf16.msra.mxu0 0
        %921 = vmatprep.subr.bf16.mxu0 0
        %922 = vmatpush1.bf16.msra.mxu0 0
        %923 = vmatprep.subr.bf16.mxu0 0
        %924 = vmatpush1.bf16.msra.mxu0 %v907
        %925 = vmatprep.subr.bf16.mxu0 0
        %926 = vmatpush2.bf16.msra.mxu0 0
        %927 = vmatprep.subr.bf16.mxu0 0
        %928 = vmatpush2.bf16.msra.mxu0 0
        %929 = vmatprep.subr.bf16.mxu0 0
        %930 = vmatpush2.bf16.msra.mxu0 0
        %931 = vmatprep.subr.bf16.mxu0 0
        %932 = vmatpush2.bf16.msra.mxu0 0
        %933 = vmatprep.subr.bf16.mxu0 0
        %934 = vmatpush2.bf16.msra.mxu0 0
        %935 = vmatprep.subr.bf16.mxu0 0
        %936 = vmatpush2.bf16.msra.mxu0 0
        %937 = vmatprep.subr.bf16.mxu0 0
        %938 = vmatpush2.bf16.msra.mxu0 0
        %939 = vmatprep.subr.bf16.mxu0 0
        %940 = vmatpush2.bf16.msra.mxu0 0
        %941 = vmatprep.mubr.bf16.mxu0 0
        %942 = vmatmul.mubr.bf16.gmra.mxu0 %v905
        %v943 = vpop.f32.mrf.mxu0
        %v944 = vadd.f32 0.0, %v943
        %v945 = vpop.f32.mrf.mxu0
        %v946 = vpop.f32.mrf.mxu0
        %v947 = vpop.f32.mrf.mxu0
        %948 = vdwg.mxu0
        %950 = vrot.lane.b32.xlu0 %v944, 8
        %v951 = vpop.permute.xlu0 %950
        %vm953 = vcmask 130112
        %954 = vst.msk [vmem:[#allocation3] sm:$0xff] %vm953, %v951
        %955 = vrot.lane.b32.xlu0 %v733, 112
        %v956 = vpop.permute.xlu0 %955
        %957 = vrot.lane.b32.xlu0 %v732, 112
        %v958 = vpop.permute.xlu0 %957
        %v960 = vsel %vm734, %v956, 0
        %v963 = vsel %vm734, %v958, 0
        %965 = vmatprep.subr.bf16.mxu0 0
        %966 = vmatpush1.bf16.xpose.msra.mxu0 0
        %967 = vmatprep.subr.bf16.mxu0 0
        %968 = vmatpush1.bf16.xpose.msra.mxu0 0
        %969 = vmatprep.subr.bf16.mxu0 0
        %970 = vmatpush1.bf16.xpose.msra.mxu0 0
        %971 = vmatprep.subr.bf16.mxu0 0
        %972 = vmatpush1.bf16.xpose.msra.mxu0 0
        %973 = vmatprep.subr.bf16.mxu0 0
        %974 = vmatpush1.bf16.xpose.msra.mxu0 0
        %975 = vmatprep.subr.bf16.mxu0 0
        %976 = vmatpush1.bf16.xpose.msra.mxu0 0
        %977 = vmatprep.subr.bf16.mxu0 0
        %978 = vmatpush1.bf16.xpose.msra.mxu0 0
        %979 = vmatprep.subr.bf16.mxu0 0
        %980 = vmatpush1.bf16.xpose.msra.mxu0 %v963
        %981 = vmatprep.subr.bf16.mxu0 0
        %982 = vmatpush2.bf16.xpose.msra.mxu0 0
        %983 = vmatprep.subr.bf16.mxu0 0
        %984 = vmatpush2.bf16.xpose.msra.mxu0 0
        %985 = vmatprep.subr.bf16.mxu0 0
        %986 = vmatpush2.bf16.xpose.msra.mxu0 0
        %987 = vmatprep.subr.bf16.mxu0 0
        %988 = vmatpush2.bf16.xpose.msra.mxu0 0
        %989 = vmatprep.subr.bf16.mxu0 0
        %990 = vmatpush2.bf16.xpose.msra.mxu0 0
        %991 = vmatprep.subr.bf16.mxu0 0
        %992 = vmatpush2.bf16.xpose.msra.mxu0 0
        %993 = vmatprep.subr.bf16.mxu0 0
        %994 = vmatpush2.bf16.xpose.msra.mxu0 0
        %995 = vmatprep.subr.bf16.mxu0 0
        %996 = vmatpush2.bf16.xpose.msra.mxu0 0
        %997 = vmatprep.mubr.bf16.mxu0 0
        %998 = vmatmul.mubr.bf16.gmra.mxu0 %v960
        %v999 = vpop.f32.mrf.mxu0
        %v1000 = vadd.f32 0.0, %v999
        %v1001 = vpop.f32.mrf.mxu0
        %v1002 = vpop.f32.mrf.mxu0
        %v1003 = vpop.f32.mrf.mxu0
        %1004 = vdwg.mxu0
        %v1005 = vsel %vm734, %v1000, -inf
        %1006 = vmax.xlane.f32.xlu0 %v1005
        %v1007 = vpop.xlane.xlu0 %1006
        %v1008 = vsub.f32 %v1000, %v1007
        %v1009 = vmul.f32 %v1008, 1.442695
        %v1010 = vpow.pop %v1009
        %v1011 = vsel %vm734, %v1010, 0.0
        %1012 = vadd.xlane.f32.xlu0 %v1011
        %v1013 = vpop.xlane.xlu0 %1012
        %v1014 = vrcp.pop %v1013
        %v1015 = vmul.f32 %v1010, %v1014
        %v1016 = vpack.c.bf16 %v1015, %v1015
        %v1018 = vsel %vm734, %v1016, 0
        %v1020 = vsel %vm796, %v958, 0
        %1022 = vmatprep.subr.bf16.mxu0 0
        %1023 = vmatpush1.bf16.msra.mxu0 0
        %1024 = vmatprep.subr.bf16.mxu0 0
        %1025 = vmatpush1.bf16.msra.mxu0 0
        %1026 = vmatprep.subr.bf16.mxu0 0
        %1027 = vmatpush1.bf16.msra.mxu0 0
        %1028 = vmatprep.subr.bf16.mxu0 0
        %1029 = vmatpush1.bf16.msra.mxu0 0
        %1030 = vmatprep.subr.bf16.mxu0 0
        %1031 = vmatpush1.bf16.msra.mxu0 0
        %1032 = vmatprep.subr.bf16.mxu0 0
        %1033 = vmatpush1.bf16.msra.mxu0 0
        %1034 = vmatprep.subr.bf16.mxu0 0
        %1035 = vmatpush1.bf16.msra.mxu0 0
        %1036 = vmatprep.subr.bf16.mxu0 0
        %1037 = vmatpush1.bf16.msra.mxu0 %v1020
        %1038 = vmatprep.subr.bf16.mxu0 0
        %1039 = vmatpush2.bf16.msra.mxu0 0
        %1040 = vmatprep.subr.bf16.mxu0 0
        %1041 = vmatpush2.bf16.msra.mxu0 0
        %1042 = vmatprep.subr.bf16.mxu0 0
        %1043 = vmatpush2.bf16.msra.mxu0 0
        %1044 = vmatprep.subr.bf16.mxu0 0
        %1045 = vmatpush2.bf16.msra.mxu0 0
        %1046 = vmatprep.subr.bf16.mxu0 0
        %1047 = vmatpush2.bf16.msra.mxu0 0
        %1048 = vmatprep.subr.bf16.mxu0 0
        %1049 = vmatpush2.bf16.msra.mxu0 0
        %1050 = vmatprep.subr.bf16.mxu0 0
        %1051 = vmatpush2.bf16.msra.mxu0 0
        %1052 = vmatprep.subr.bf16.mxu0 0
        %1053 = vmatpush2.bf16.msra.mxu0 0
        %1054 = vmatprep.mubr.bf16.mxu0 0
        %1055 = vmatmul.mubr.bf16.gmra.mxu0 %v1018
        %v1056 = vpop.f32.mrf.mxu0
        %v1057 = vadd.f32 0.0, %v1056
        %v1058 = vpop.f32.mrf.mxu0
        %v1059 = vpop.f32.mrf.mxu0
        %v1060 = vpop.f32.mrf.mxu0
        %1061 = vdwg.mxu0
        %1063 = vrot.lane.b32.xlu0 %v1057, 16
        %v1064 = vpop.permute.xlu0 %1063
        %vm1066 = vcmask 195712
        %1067 = vst.msk [vmem:[#allocation3] sm:$0xff] %vm1066, %v1064
        %1068 = vrot.lane.b32.xlu0 %v733, 104
        %v1069 = vpop.permute.xlu0 %1068
        %1070 = vrot.lane.b32.xlu0 %v732, 104
        %v1071 = vpop.permute.xlu0 %1070
        %v1073 = vsel %vm734, %v1069, 0
        %v1076 = vsel %vm734, %v1071, 0
        %1078 = vmatprep.subr.bf16.mxu0 0
        %1079 = vmatpush1.bf16.xpose.msra.mxu0 0
        %1080 = vmatprep.subr.bf16.mxu0 0
        %1081 = vmatpush1.bf16.xpose.msra.mxu0 0
        %1082 = vmatprep.subr.bf16.mxu0 0
        %1083 = vmatpush1.bf16.xpose.msra.mxu0 0
        %1084 = vmatprep.subr.bf16.mxu0 0
        %1085 = vmatpush1.bf16.xpose.msra.mxu0 0
        %1086 = vmatprep.subr.bf16.mxu0 0
        %1087 = vmatpush1.bf16.xpose.msra.mxu0 0
        %1088 = vmatprep.subr.bf16.mxu0 0
        %1089 = vmatpush1.bf16.xpose.msra.mxu0 0
        %1090 = vmatprep.subr.bf16.mxu0 0
        %1091 = vmatpush1.bf16.xpose.msra.mxu0 0
        %1092 = vmatprep.subr.bf16.mxu0 0
        %1093 = vmatpush1.bf16.xpose.msra.mxu0 %v1076
        %1094 = vmatprep.subr.bf16.mxu0 0
        %1095 = vmatpush2.bf16.xpose.msra.mxu0 0
        %1096 = vmatprep.subr.bf16.mxu0 0
        %1097 = vmatpush2.bf16.xpose.msra.mxu0 0
        %1098 = vmatprep.subr.bf16.mxu0 0
        %1099 = vmatpush2.bf16.xpose.msra.mxu0 0
        %1100 = vmatprep.subr.bf16.mxu0 0
        %1101 = vmatpush2.bf16.xpose.msra.mxu0 0
        %1102 = vmatprep.subr.bf16.mxu0 0
        %1103 = vmatpush2.bf16.xpose.msra.mxu0 0
        %1104 = vmatprep.subr.bf16.mxu0 0
        %1105 = vmatpush2.bf16.xpose.msra.mxu0 0
        %1106 = vmatprep.subr.bf16.mxu0 0
        %1107 = vmatpush2.bf16.xpose.msra.mxu0 0
        %1108 = vmatprep.subr.bf16.mxu0 0
        %1109 = vmatpush2.bf16.xpose.msra.mxu0 0
        %1110 = vmatprep.mubr.bf16.mxu0 0
        %1111 = vmatmul.mubr.bf16.gmra.mxu0 %v1073
        %v1112 = vpop.f32.mrf.mxu0
        %v1113 = vadd.f32 0.0, %v1112
        %v1114 = vpop.f32.mrf.mxu0
        %v1115 = vpop.f32.mrf.mxu0
        %v1116 = vpop.f32.mrf.mxu0
        %1117 = vdwg.mxu0
        %v1118 = vsel %vm734, %v1113, -inf
        %1119 = vmax.xlane.f32.xlu0 %v1118
        %v1120 = vpop.xlane.xlu0 %1119
        %v1121 = vsub.f32 %v1113, %v1120
        %v1122 = vmul.f32 %v1121, 1.442695
        %v1123 = vpow.pop %v1122
        %v1124 = vsel %vm734, %v1123, 0.0
        %1125 = vadd.xlane.f32.xlu0 %v1124
        %v1126 = vpop.xlane.xlu0 %1125
        %v1127 = vrcp.pop %v1126
        %v1128 = vmul.f32 %v1123, %v1127
        %v1129 = vpack.c.bf16 %v1128, %v1128
        %v1131 = vsel %vm734, %v1129, 0
        %v1133 = vsel %vm796, %v1071, 0
        %1135 = vmatprep.subr.bf16.mxu0 0
        %1136 = vmatpush1.bf16.msra.mxu0 0
        %1137 = vmatprep.subr.bf16.mxu0 0
        %1138 = vmatpush1.bf16.msra.mxu0 0
        %1139 = vmatprep.subr.bf16.mxu0 0
        %1140 = vmatpush1.bf16.msra.mxu0 0
        %1141 = vmatprep.subr.bf16.mxu0 0
        %1142 = vmatpush1.bf16.msra.mxu0 0
        %1143 = vmatprep.subr.bf16.mxu0 0
        %1144 = vmatpush1.bf16.msra.mxu0 0
        %1145 = vmatprep.subr.bf16.mxu0 0
        %1146 = vmatpush1.bf16.msra.mxu0 0
        %1147 = vmatprep.subr.bf16.mxu0 0
        %1148 = vmatpush1.bf16.msra.mxu0 0
        %1149 = vmatprep.subr.bf16.mxu0 0
        %1150 = vmatpush1.bf16.msra.mxu0 %v1133
        %1151 = vmatprep.subr.bf16.mxu0 0
        %1152 = vmatpush2.bf16.msra.mxu0 0
        %1153 = vmatprep.subr.bf16.mxu0 0
        %1154 = vmatpush2.bf16.msra.mxu0 0
        %1155 = vmatprep.subr.bf16.mxu0 0
        %1156 = vmatpush2.bf16.msra.mxu0 0
        %1157 = vmatprep.subr.bf16.mxu0 0
        %1158 = vmatpush2.bf16.msra.mxu0 0
        %1159 = vmatprep.subr.bf16.mxu0 0
        %1160 = vmatpush2.bf16.msra.mxu0 0
        %1161 = vmatprep.subr.bf16.mxu0 0
        %1162 = vmatpush2.bf16.msra.mxu0 0
        %1163 = vmatprep.subr.bf16.mxu0 0
        %1164 = vmatpush2.bf16.msra.mxu0 0
        %1165 = vmatprep.subr.bf16.mxu0 0
        %1166 = vmatpush2.bf16.msra.mxu0 0
        %1167 = vmatprep.mubr.bf16.mxu0 0
        %1168 = vmatmul.mubr.bf16.gmra.mxu0 %v1131
        %v1169 = vpop.f32.mrf.mxu0
        %v1170 = vadd.f32 0.0, %v1169
        %v1171 = vpop.f32.mrf.mxu0
        %v1172 = vpop.f32.mrf.mxu0
        %v1173 = vpop.f32.mrf.mxu0
        %1174 = vdwg.mxu0
        %1176 = vrot.lane.b32.xlu0 %v1170, 24
        %v1177 = vpop.permute.xlu0 %1176
        %vm1179 = vcmask 261312
        %1180 = vst.msk [vmem:[#allocation3] sm:$0xff] %vm1179, %v1177
        %v1181 = vld [vmem:[#allocation3] sm:$0xff]
        %v1182 = vpack.c.bf16 %v1181, %v1181
        %v1183 = vld [vmem:[%s528] sm:$0xf]
        %v1184 = vld [vmem:[%s528 + $0x4] sm:$0xf]
        %v1185 = vld [vmem:[%s528 + $0x8] sm:$0xf]
        %v1186 = vld [vmem:[%s528 + $0xc] sm:$0xf]
        %v1187 = vld [vmem:[%s624] sm:$0x1]
        %v1189 = vlaneseq
        %v1190 = vshrl.u32 %v1189, 7
        %v1191 = vsub.s32 0, %v1190
        %v1192 = vrot.slane %v1187, %v1191
        %v1198 = vunpack.c.l.b16 %v1183
        %v1199 = vunpack.c.l.b16 %v1184
        %v1200 = vunpack.c.l.b16 %v1185
        %v1201 = vunpack.c.l.b16 %v1186
        %v1202 = vpack.c.b16 %v1199, %v1198
        %v1203 = vpack.c.b16 %v1201, %v1200
        %v1207 = vsel %vm640, %v1182, 0
        %1209 = vmatprep.subr.bf16.mxu0 0
        %1210 = vmatpush1.bf16.msra.mxu0 0
        %1211 = vmatprep.subr.bf16.mxu0 0
        %1212 = vmatpush1.bf16.msra.mxu0 0
        %1213 = vmatprep.subr.bf16.mxu0 0
        %1214 = vmatpush1.bf16.msra.mxu0 0
        %1215 = vmatprep.subr.bf16.mxu0 0
        %1216 = vmatpush1.bf16.msra.mxu0 0
        %1217 = vmatprep.subr.bf16.mxu0 0
        %1218 = vmatpush1.bf16.msra.mxu0 0
        %1219 = vmatprep.subr.bf16.mxu0 0
        %1220 = vmatpush1.bf16.msra.mxu0 0
        %1221 = vmatprep.subr.bf16.mxu0 0
        %1222 = vmatpush1.bf16.msra.mxu0 %v1203
        %1223 = vmatprep.subr.bf16.mxu0 0
        %1224 = vmatpush1.bf16.msra.mxu0 %v1202
        %1225 = vmatprep.subr.bf16.mxu0 0
        %1226 = vmatpush2.bf16.msra.mxu0 0
        %1227 = vmatprep.subr.bf16.mxu0 0
        %1228 = vmatpush2.bf16.msra.mxu0 0
        %1229 = vmatprep.subr.bf16.mxu0 0
        %1230 = vmatpush2.bf16.msra.mxu0 0
        %1231 = vmatprep.subr.bf16.mxu0 0
        %1232 = vmatpush2.bf16.msra.mxu0 0
        %1233 = vmatprep.subr.bf16.mxu0 0
        %1234 = vmatpush2.bf16.msra.mxu0 0
        %1235 = vmatprep.subr.bf16.mxu0 0
        %1236 = vmatpush2.bf16.msra.mxu0 0
        %1237 = vmatprep.subr.bf16.mxu0 0
        %1238 = vmatpush2.bf16.msra.mxu0 0
        %1239 = vmatprep.subr.bf16.mxu0 0
        %1240 = vmatpush2.bf16.msra.mxu0 0
        %1241 = vmatprep.mubr.bf16.mxu0 0
        %1242 = vmatmul.mubr.bf16.gmra.mxu0 %v1207
        %v1243 = vpop.f32.mrf.mxu0
        %v1244 = vadd.f32 %v1192, %v1243
        %v1245 = vpop.f32.mrf.mxu0
        %v1246 = vpop.f32.mrf.mxu0
        %v1247 = vpop.f32.mrf.mxu0
        %1248 = vdwg.mxu0
        %v1249 = vadd.f32 %v1244, %v639
        %v1250 = vsel %vm640, %v1249, 0.0
        %1251 = vadd.xlane.f32.xlu0 %v1250
        %v1252 = vpop.xlane.xlu0 %1251
        %v1253 = vmul.f32 %v1252, %v644
        %v1254 = vsub.f32 %v1249, %v1253
        %v1255 = vmul.f32 %v1254, %v1254
        %v1256 = vsel %vm640, %v1255, 0.0
        %1257 = vadd.xlane.f32.xlu0 %v1256
        %v1258 = vpop.xlane.xlu0 %1257
        %v1259 = vmul.f32 %v1258, %v644
        %v1260 = vadd.f32 %v1259, 1e-05
        %v1261 = vrsqrt.pop %v1260
        %v1262 = vmul.f32 %v1254, %v1261
        %v1263 = vld [vmem:[%s627] sm:$0x1]
        %v1265 = vlaneseq
        %v1266 = vshrl.u32 %v1265, 7
        %v1267 = vsub.s32 0, %v1266
        %v1268 = vrot.slane %v1263, %v1267
        %v1270 = vmul.f32 %v1262, %v1268
        %v1271 = vld [vmem:[%s630] sm:$0x1]
        %v1273 = vlaneseq
        %v1274 = vshrl.u32 %v1273, 7
        %v1275 = vsub.s32 0, %v1274
        %v1276 = vrot.slane %v1271, %v1275
        %v1278 = vadd.f32 %v1270, %v1276
        %v1279 = vpack.c.bf16 %v1278, %v1278
        %v1280 = vld [vmem:[%s546] sm:$0xf]
        %v1281 = vld [vmem:[%s546 + $0x4] sm:$0xf]
        %v1282 = vld [vmem:[%s546 + $0x8] sm:$0xf]
        %v1283 = vld [vmem:[%s546 + $0xc] sm:$0xf]
        %v1288 = vunpack.c.l.b16 %v1280
        %v1289 = vunpack.c.l.b16 %v1281
        %v1290 = vunpack.c.l.b16 %v1282
        %v1291 = vunpack.c.l.b16 %v1283
        %v1292 = vpack.c.b16 %v1289, %v1288
        %v1293 = vpack.c.b16 %v1291, %v1290
        %v1297 = vsel %vm640, %v1279, 0
        %1299 = vmatprep.subr.bf16.mxu0 0
        %1300 = vmatpush1.bf16.msra.mxu0 0
        %1301 = vmatprep.subr.bf16.mxu0 0
        %1302 = vmatpush1.bf16.msra.mxu0 0
        %1303 = vmatprep.subr.bf16.mxu0 0
        %1304 = vmatpush1.bf16.msra.mxu0 0
        %1305 = vmatprep.subr.bf16.mxu0 0
        %1306 = vmatpush1.bf16.msra.mxu0 0
        %1307 = vmatprep.subr.bf16.mxu0 0
        %1308 = vmatpush1.bf16.msra.mxu0 0
        %1309 = vmatprep.subr.bf16.mxu0 0
        %1310 = vmatpush1.bf16.msra.mxu0 0
        %1311 = vmatprep.subr.bf16.mxu0 0
        %1312 = vmatpush1.bf16.msra.mxu0 %v1293
        %1313 = vmatprep.subr.bf16.mxu0 0
        %1314 = vmatpush1.bf16.msra.mxu0 %v1292
        %1315 = vmatprep.subr.bf16.mxu0 0
        %1316 = vmatpush2.bf16.msra.mxu0 0
        %1317 = vmatprep.subr.bf16.mxu0 0
        %1318 = vmatpush2.bf16.msra.mxu0 0
        %1319 = vmatprep.subr.bf16.mxu0 0
        %1320 = vmatpush2.bf16.msra.mxu0 0
        %1321 = vmatprep.subr.bf16.mxu0 0
        %1322 = vmatpush2.bf16.msra.mxu0 0
        %1323 = vmatprep.subr.bf16.mxu0 0
        %1324 = vmatpush2.bf16.msra.mxu0 0
        %1325 = vmatprep.subr.bf16.mxu0 0
        %1326 = vmatpush2.bf16.msra.mxu0 0
        %1327 = vmatprep.subr.bf16.mxu0 0
        %1328 = vmatpush2.bf16.msra.mxu0 0
        %1329 = vmatprep.subr.bf16.mxu0 0
        %1330 = vmatpush2.bf16.msra.mxu0 0
        %1331 = vmatprep.mubr.bf16.mxu0 0
        %1332 = vmatmul.mubr.bf16.gmra.mxu0 %v1297
        %v1333 = vpop.f32.mrf.mxu0
        %v1334 = vadd.f32 0.0, %v1333
        %v1335 = vpop.f32.mrf.mxu0
        %v1336 = vpop.f32.mrf.mxu0
        %v1337 = vpop.f32.mrf.mxu0
        %1338 = vdwg.mxu0
        %v1339 = vsub.f32 %v1278, %v1334
        %v1340 = vpack.c.bf16 %v1339, %v1339
        %v1341 = vld [vmem:[%s537] sm:$0xf]
        %v1342 = vld [vmem:[%s537 + $0x4] sm:$0xf]
        %v1343 = vld [vmem:[%s537 + $0x8] sm:$0xf]
        %v1344 = vld [vmem:[%s537 + $0xc] sm:$0xf]
        %v1349 = vunpack.c.l.b16 %v1341
        %v1350 = vunpack.c.l.b16 %v1342
        %v1351 = vunpack.c.l.b16 %v1343
        %v1352 = vunpack.c.l.b16 %v1344
        %v1353 = vpack.c.b16 %v1350, %v1349
        %v1354 = vpack.c.b16 %v1352, %v1351
        %v1358 = vsel %vm640, %v1340, 0
        %1360 = vmatprep.subr.bf16.mxu0 0
        %1361 = vmatpush1.bf16.msra.mxu0 0
        %1362 = vmatprep.subr.bf16.mxu0 0
        %1363 = vmatpush1.bf16.msra.mxu0 0
        %1364 = vmatprep.subr.bf16.mxu0 0
        %1365 = vmatpush1.bf16.msra.mxu0 0
        %1366 = vmatprep.subr.bf16.mxu0 0
        %1367 = vmatpush1.bf16.msra.mxu0 0
        %1368 = vmatprep.subr.bf16.mxu0 0
        %1369 = vmatpush1.bf16.msra.mxu0 0
        %1370 = vmatprep.subr.bf16.mxu0 0
        %1371 = vmatpush1.bf16.msra.mxu0 0
        %1372 = vmatprep.subr.bf16.mxu0 0
        %1373 = vmatpush1.bf16.msra.mxu0 %v1354
        %1374 = vmatprep.subr.bf16.mxu0 0
        %1375 = vmatpush1.bf16.msra.mxu0 %v1353
        %1376 = vmatprep.subr.bf16.mxu0 0
        %1377 = vmatpush2.bf16.msra.mxu0 0
        %1378 = vmatprep.subr.bf16.mxu0 0
        %1379 = vmatpush2.bf16.msra.mxu0 0
        %1380 = vmatprep.subr.bf16.mxu0 0
        %1381 = vmatpush2.bf16.msra.mxu0 0
        %1382 = vmatprep.subr.bf16.mxu0 0
        %1383 = vmatpush2.bf16.msra.mxu0 0
        %1384 = vmatprep.subr.bf16.mxu0 0
        %1385 = vmatpush2.bf16.msra.mxu0 0
        %1386 = vmatprep.subr.bf16.mxu0 0
        %1387 = vmatpush2.bf16.msra.mxu0 0
        %1388 = vmatprep.subr.bf16.mxu0 0
        %1389 = vmatpush2.bf16.msra.mxu0 0
        %1390 = vmatprep.subr.bf16.mxu0 0
        %1391 = vmatpush2.bf16.msra.mxu0 0
        %1392 = vmatprep.mubr.bf16.mxu0 0
        %1393 = vmatmul.mubr.bf16.gmra.mxu0 %v1358
        %v1394 = vpop.f32.mrf.mxu0
        %v1395 = vadd.f32 0.0, %v1394
        %v1396 = vpop.f32.mrf.mxu0
        %v1397 = vpop.f32.mrf.mxu0
        %v1398 = vpop.f32.mrf.mxu0
        %1399 = vdwg.mxu0
        %v1400 = vmul.f32 %v1395, 0.1
        %v1401 = vadd.f32 %v1278, %v1400
        %v1402 = vsub.f32 %v1401, 0.01
        %v1403 = vmax.f32 %v1402, 0.0
        %1404 = vst.msk [vmem:[#allocation2] sm:$0xff] %vm640, %v1403
        %p1405 = scmp.eq.s32.totalorder %s41, 1
        // Predicated region
        $region89: #{tpu_custom_call.1} parent=59 // pred_check
          %p1406 = pneg %p1405
        $region90: #{tpu_custom_call.1} parent=59 // pred_check_branch
          %1408 = sbr.rel (%p1406) target = $region92
        $region91: #{tpu_custom_call.1} parent=59 // pred_region
          %1409 = vst.msk [vmem:[%s618] sm:$0xff] %vm640, %v1403
        $region92: #{tpu_custom_call.1} parent=59 // pred_fallthru
          _
        %s1410 = sand.u32 %s316, 1
        %s1411 = scalar_lea.sflag [#allocation6], %s1410
        %s1412 = sand.u32 %s316, 1
        %s1413 = smul.addr %s1412, 8
        %s1414 = scalar_lea.vmem [#allocation15], %s1413
        // Predicated region
        $region93: #{tpu_custom_call.1} parent=59 // pred_check
          %p1415 = pneg %p326
        $region94: #{tpu_custom_call.1} parent=59 // pred_check_branch
          %1417 = sbr.rel (%p1415) target = $region96
        $region95: #{tpu_custom_call.1} parent=59 // pred_region
          %s1419 = ssub.s32 128, 128
          %1420 = vsyncadd %s1411, %s1419
          %s1421 = smul.addr %s40, 128
          %s1422 = scalar_lea.hbm %s10, %s1421
          %s1424 = sshll.u32 %s1414, 4
          %s1425 = int_to_ptr.vmem [resolvable:$true] %s1424
          %1427 = dma.vmem_to_hbm [thread:$0]  %s1425, 128, %s1422, %s1411
        $region96: #{tpu_custom_call.1} parent=59 // pred_fallthru
          _
      $region60: #{tpu_custom_call.1} parent=5 // pred_fallthru
        _
      %p1428 = scmp.le.s32.totalorder 2, %s31
      // Predicated region
      $region97: #{tpu_custom_call.1} parent=5 // pred_check
        %p1429 = pneg %p1428
      $region98: #{tpu_custom_call.1} parent=5 // pred_check_branch
        %1431 = sbr.rel (%p1429) target = $region100
      $region99: #{tpu_custom_call.1} parent=5 // pred_region
        %s1432 = ssub.s32 %s31, 2
        // Predicated region
        $region101: #{tpu_custom_call.1} parent=99 // pred_check
          %p1433 = pneg %p332
        $region102: #{tpu_custom_call.1} parent=99 // pred_check_branch
          %1435 = sbr.rel (%p1433) target = $region104
        $region103: #{tpu_custom_call.1} parent=99 // pred_region
          %s1436 = sand.u32 %s317, 1
          %s1437 = scalar_lea.sflag [#allocation6], %s1436
          %s1438 = sand.u32 %s317, 1
          %s1439 = smul.addr %s1438, 8
          %s1440 = scalar_lea.vmem [#allocation15], %s1439
          %1441 = dma.done %s1437, 128
        $region104: #{tpu_custom_call.1} parent=99 // pred_fallthru
          _
      $region100: #{tpu_custom_call.1} parent=5 // pred_fallthru
        _
    $region6: #{tpu_custom_call.1} parent=1 // loop_footer
      %s35 = sadd.s32 1, %s31
    $region7: #{tpu_custom_call.1} parent=1 // loop_footer_branch
      %30 = sbr.rel target = $region3
    $region8: #{tpu_custom_call.1} parent=1 // loop_exit
      _
    %1442 = vsyncpa [#allocation5], 1
    %s1443 = scalar_lea.sflag [#allocation5], 1
    %1444 = vsyncpa %s1443, 1
    %1445 = vsyncpa [#allocation8], 1
    %s1446 = scalar_lea.sflag [#allocation8], 1
    %1447 = vsyncpa %s1446, 1
    %1448 = vsyncpa [#allocation11], 1
    %s1449 = scalar_lea.sflag [#allocation11], 1
    %1450 = vsyncpa %s1449, 1
    %1451 = vsyncpa [#allocation14], 1
    %s1452 = scalar_lea.sflag [#allocation14], 1
    %1453 = vsyncpa %s1452, 1
    %1454 = vsyncpa [#allocation6], 1
    %s1455 = scalar_lea.sflag [#allocation6], 1
    %1456 = vsyncpa %s1455, 1

</llo_original>
